<compile_context>
chip_gen: v5e
topology: v5e:2x2
jax: 0.10.0
libtpu: 0.0.40
codegen_flags: <defaults>
</compile_context>

<pallas_src>
import functools

import jax
import jax.numpy as jnp
from jax.experimental import pallas as pl
from jax.experimental.pallas import tpu as pltpu

NBINS = 255          # torch.histc(bins=255, min=0.0, max=1.0)
NBINS_PAD = 256      # pad the bin axis to a full sublane/lane tile
LANES = 128


def _round_up(x, m):
    return ((x + m - 1) // m) * m


def _hist_prior_loss_kernel(vals_ref, ones_ref, out_t_ref, ps_t_ref, w_ref,
                            loss_ref, acc_ref, *, nbins, lambda_smooth):
    # vals_ref : (1, 1, TILE_M) f32  downsampled channel-mean pixels (lane-dense)
    # ones_ref : (TILE_M, 128) bf16  ones matrix (MXU reduction rhs), constant block
    # out_t_ref, ps_t_ref : (255, B) f32  tone curves, transposed, constant blocks
    # w_ref    : (1, 1) f32          weight on curve_loss (1.0; 0.5 once step >= 3000)
    # loss_ref : (1, 1) f32          scalar output, written on the last grid step
    # acc_ref  : (256, 128) f32      persistent CDF accumulator (all lanes identical)
    step = pl.program_id(0)

    @pl.when(step == 0)
    def _init():
        acc_ref[...] = jnp.zeros_like(acc_ref)

    vals = vals_ref[0].astype(jnp.float32)              # (1, TILE_M)
    tile_m = vals.shape[-1]

    # torch.histc(bins=255, min=0, max=1): out-of-range values are ignored and the
    # value 1.0 lands in the last bin.  Wrapper padding is -1.0 -> always invalid.
    # NOTE: floor(v*255) may differ from torch.histc by one bin for values exactly on
    # a bin edge (FP rounding) — edge values only.
    valid = jnp.logical_and(vals >= 0.0, vals <= 1.0)
    bins = jnp.clip(jnp.floor(vals * float(nbins)).astype(jnp.int32), 0, nbins - 1)
    bins = jnp.where(valid, bins, NBINS_PAD)            # invalid -> never counted

    # mask[j, p] = 1 iff pixel p has bin <= j  (cumulative-histogram mask).
    # Thresholds j = 0..255 live on sublanes, pixels on lanes -> the lane-dense pixel
    # row needs no relayout and the pixel reduction maps straight onto the MXU.
    thresh = jax.lax.broadcasted_iota(jnp.int32, (NBINS_PAD, tile_m), 0)
    mask_bf = (bins <= thresh).astype(jnp.bfloat16)     # (256, TILE_M)

    # Reduce over pixels on the MXU: (256, TILE_M) @ (TILE_M, 128) -> (256, 128) f32.
    # All 128 result lanes are identical; counts are exact in f32 (< 2^24 pixels).
    acc_ref[...] += jnp.dot(mask_bf, ones_ref[...],
                            preferred_element_type=jnp.float32)

    @pl.when(step == pl.num_programs(0) - 1)
    def _finalize():
        cdf = acc_ref[:, 0:1]                           # (256, 1); cdf[j] = #{bin <= j}
        # cdf[254] == number of valid pixels (== cdf[-1] of the true 255 bins).
        total = jnp.maximum(cdf[nbins - 1:nbins, :], 1.0)    # guard against 0 division
        prior = cdf[:nbins, :] / total                  # (255, 1) hist-eq prior column

        out_t = out_t_ref[...].astype(jnp.float32)      # (255, B)
        ps_t = ps_t_ref[...].astype(jnp.float32)        # (255, B)
        n_el = float(out_t.shape[0] * out_t.shape[1])

        d = out_t - prior
        curve_l = jnp.sum(d * d, keepdims=True) / n_el           # (1, 1)

        dp = ps_t - out_t
        p1 = jnp.sum(dp * dp, keepdims=True) / n_el
        dh = ps_t - prior
        p2 = jnp.sum(dh * dh, keepdims=True) / n_el
        psedo_l = p1 + 0.01 * p2

        ds = out_t[1:, :] - out_t[:-1, :]
        smooth_l = (jnp.sum(ds * ds, keepdims=True)
                    / float((out_t.shape[0] - 1) * out_t.shape[1]))

        loss_ref[...] = (w_ref[...] * curve_l
                         + lambda_smooth * smooth_l
                         + 0.5 * psedo_l)


def histogram_prior_loss(output, inp, psedo_curve, step, lambda_smooth=0.1,
                         tile_m=2048):
    """output, psedo_curve: (B, 255); inp: (B, H, W, C) NHWC; step: int / scalar."""
    _, h, w, _ = inp.shape
    b_curve, nb = output.shape
    assert nb == NBINS, "tone curves must have 255 entries (torch.histc bins)"

    # F.interpolate(NCHW, scale_factor=0.25, mode='nearest') == stride-4 subsample;
    # fused with the channel mean (torch.mean(..., dim=1)) here in plain XLA so the
    # kernel streams only 4 bytes per downsampled pixel.
    h4, w4 = h // 4, w // 4
    xs = inp[:, : 4 * h4: 4, : 4 * w4: 4, :]
    vals = jnp.mean(xs.astype(jnp.float32), axis=-1).reshape(-1)       # (M,)
    m = vals.shape[0]

    # Lane-dense tiling of the pixel stream: (num_tiles, 1, TILE_M); pad with -1.0
    # (outside [0, 1]) so padding never lands in the histogram.
    tm = _round_up(min(int(tile_m), _round_up(m, LANES)), LANES)
    m_pad = _round_up(m, tm)
    num_tiles = m_pad // tm
    vals = jnp.pad(vals, (0, m_pad - m), constant_values=-1.0)
    vals3d = vals.reshape(num_tiles, 1, tm)

    # Transposed curves: the prior comes out of the MXU reduce as a (255, 1) column,
    # so (255, B) curves broadcast against it with no in-kernel relayout.
    out_t = output.astype(jnp.float32).T                               # (255, B)
    ps_t = psedo_curve.astype(jnp.float32).T                           # (255, B)

    # step >= 3000 -> 0.5 * curve_loss, else 1.0 * curve_loss
    c_w = jnp.where(jnp.asarray(step) >= 3000, 0.5, 1.0)
    c_w = c_w.astype(jnp.float32).reshape(1, 1)

    ones_bf = jnp.ones((tm, LANES), jnp.bfloat16)   # MXU reduction rhs (loaded once)

    kernel = functools.partial(_hist_prior_loss_kernel, nbins=NBINS,
                               lambda_smooth=float(lambda_smooth))

    loss = pl.pallas_call(
        kernel,
        out_shape=jax.ShapeDtypeStruct((1, 1), jnp.float32),
        grid=(num_tiles,),
        in_specs=[
            pl.BlockSpec((1, 1, tm), lambda i: (i, 0, 0)),       # pixel tiles
            pl.BlockSpec((tm, LANES), lambda i: (0, 0)),         # ones (constant block)
            pl.BlockSpec((NBINS, b_curve), lambda i: (0, 0)),    # output^T
            pl.BlockSpec((NBINS, b_curve), lambda i: (0, 0)),    # psedo_curve^T
            pl.BlockSpec((1, 1), lambda i: (0, 0)),              # curve-loss weight
        ],
        out_specs=pl.BlockSpec((1, 1), lambda i: (0, 0)),
        scratch_shapes=[pltpu.VMEM((NBINS_PAD, LANES), jnp.float32)],
        compiler_params=pltpu.CompilerParams(
            dimension_semantics=("arbitrary",),     # sequential CDF accumulation
            vmem_limit_bytes=32 * 1024 * 1024,
        ),
    )(vals3d, ones_bf, out_t, ps_t, c_w)
    return loss[0, 0]


def _reference_loss(output, inp, psedo_curve, step, lambda_smooth=0.1):
    """Pure-JAX reference mirroring the PyTorch module (for sanity check)."""
    xs = inp[:, ::4, ::4, :]
    vals = jnp.mean(xs.astype(jnp.float32), axis=-1).reshape(-1)
    valid = (vals >= 0.0) & (vals <= 1.0)
    bins = jnp.clip(jnp.floor(vals * NBINS), 0, NBINS - 1).astype(jnp.int32)
    hist = jnp.zeros((NBINS,), jnp.float32).at[bins].add(jnp.where(valid, 1.0, 0.0))
    cdf = jnp.cumsum(hist)
    prior = (cdf / cdf[-1])[None, :]
    curve = jnp.mean((output - prior) ** 2)
    psedo = (jnp.mean((psedo_curve - output) ** 2)
             + 0.01 * jnp.mean((psedo_curve - prior) ** 2))
    smooth = jnp.mean((output[:, 1:] - output[:, :-1]) ** 2)
    c = jnp.where(jnp.asarray(step) >= 3000, 0.5, 1.0)
    return c * curve + lambda_smooth * smooth + 0.5 * psedo


if __name__ == "__main__":
    key = jax.random.PRNGKey(0)
    k1, k2, k3 = jax.random.split(key, 3)

    B, H, W, C = 2, 16, 16, 3
    inp = jax.random.uniform(k1, (B, H, W, C), jnp.float32)           # values in [0, 1]
    # monotone "tone curves" in [0, 1] for output / pseudo curve
    output = jnp.sort(jax.random.uniform(k2, (B, NBINS), jnp.float32), axis=1)
    psedo_curve = jnp.sort(jax.random.uniform(k3, (B, NBINS), jnp.float32), axis=1)
    step = 100

    loss = jax.block_until_ready(histogram_prior_loss(output, inp, psedo_curve, step))
    ref = jax.block_until_ready(_reference_loss(output, inp, psedo_curve, step))
    assert jnp.isfinite(loss), "kernel produced non-finite loss"
    assert jnp.allclose(loss, ref, rtol=1e-5, atol=1e-6), (loss, ref)

    # Exercise the multi-tile (gridded) accumulation path and the step>=3000 weight.
    inp2 = jax.random.uniform(jax.random.PRNGKey(1), (1, 128, 96, C), jnp.float32)
    loss2 = jax.block_until_ready(
        histogram_prior_loss(output, inp2, psedo_curve, 5000, tile_m=256))
    ref2 = jax.block_until_ready(_reference_loss(output, inp2, psedo_curve, 5000))
    assert jnp.allclose(loss2, ref2, rtol=1e-5, atol=1e-6), (loss2, ref2)

    # TODO(synk): the standalone `curve_loss` helper is not used by the module's
    # forward pass, so it is not lowered to a kernel here.
    print("KERNEL_OK")
</pallas_src>

<mosaic_0001>
module attributes {stable_mosaic.version = 11 : i64} {
  func.func @_hist_prior_loss_kernel(%arg0: i32, %arg1: memref<1x1x128xf32, #tpu.memory_space<vmem>>, %arg2: memref<128x128xbf16, #tpu.memory_space<vmem>>, %arg3: memref<255x2xf32, #tpu.memory_space<vmem>>, %arg4: memref<255x2xf32, #tpu.memory_space<vmem>>, %arg5: memref<1x1xf32, #tpu.memory_space<vmem>>, %arg6: memref<1x1xf32, #tpu.memory_space<vmem>>, %arg7: memref<256x128xf32, #tpu.memory_space<vmem>>) attributes {dimension_semantics = [#tpu.dimension_semantics<arbitrary>], iteration_bounds = array<i64: 1>, scalar_prefetch = 0 : i64, scratch_operands = 1 : i64, tpu.core_type = #tpu.core_type<tc>, window_params = [{transform_indices = @transform_0, window_bounds = array<i64: 1, 1, 128>}, {pipeline_mode = #tpu.pipeline_mode<synchronous>, transform_indices = @transform_1, window_bounds = array<i64: 128, 128>}, {pipeline_mode = #tpu.pipeline_mode<synchronous>, transform_indices = @transform_2, window_bounds = array<i64: 255, 2>}, {pipeline_mode = #tpu.pipeline_mode<synchronous>, transform_indices = @transform_3, window_bounds = array<i64: 255, 2>}, {pipeline_mode = #tpu.pipeline_mode<synchronous>, transform_indices = @transform_4, window_bounds = array<i64: 1, 1>}, {pipeline_mode = #tpu.pipeline_mode<synchronous>, transform_indices = @transform_5, window_bounds = array<i64: 1, 1>}]} {
    %c0_i32 = arith.constant 0 : i32
    %0 = arith.cmpi eq, %arg0, %c0_i32 : i32
    %1 = arith.extui %0 : i1 to i32
    %c0_i32_0 = arith.constant 0 : i32
    %2 = arith.cmpi ne, %1, %c0_i32_0 : i32
    scf.if %2 {
      %cst_15 = arith.constant 0.000000e+00 : f32
      %34 = vector.broadcast %cst_15 : f32 to vector<256x128xf32>
      %c0_16 = arith.constant 0 : index
      %c0_17 = arith.constant 0 : index
      %35 = vector.load %arg7[%c0_16, %c0_17] : memref<256x128xf32, #tpu.memory_space<vmem>>, vector<256x128xf32>
      tpu.vector_store %arg7[%c0_16, %c0_17], %34 {strides = array<i32>} : memref<256x128xf32, #tpu.memory_space<vmem>>, vector<256x128xf32>,
    } else {
    }
    %c0 = arith.constant 0 : index
    %c0_1 = arith.constant 0 : index
    %c0_2 = arith.constant 0 : index
    %3 = vector.load %arg1[%c0, %c0_1, %c0_2] : memref<1x1x128xf32, #tpu.memory_space<vmem>>, vector<1x1x128xf32>
    %4 = vector.shape_cast %3 : vector<1x1x128xf32> to vector<1x128xf32>
    %cst = arith.constant 0.000000e+00 : f32
    %5 = vector.broadcast %cst : f32 to vector<1x128xf32>
    %6 = arith.cmpf oge, %4, %5 : vector<1x128xf32>
    %cst_3 = arith.constant 1.000000e+00 : f32
    %7 = vector.broadcast %cst_3 : f32 to vector<1x128xf32>
    %8 = arith.cmpf ole, %4, %7 : vector<1x128xf32>
    %9 = arith.andi %6, %8 : vector<1x128xi1>
    %cst_4 = arith.constant 2.550000e+02 : f32
    %10 = vector.broadcast %cst_4 : f32 to vector<1x128xf32>
    %11 = arith.mulf %4, %10 : vector<1x128xf32>
    %12 = math.floor %11 : vector<1x128xf32>
    %13 = arith.fptosi %12 : vector<1x128xf32> to vector<1x128xi32>
    %c0_i32_5 = arith.constant 0 : i32
    %c254_i32 = arith.constant 254 : i32
    %14 = vector.broadcast %c0_i32_5 : i32 to vector<1x128xi32>
    %15 = arith.maxsi %14, %13 : vector<1x128xi32>
    %16 = vector.broadcast %c254_i32 : i32 to vector<1x128xi32>
    %17 = arith.minsi %16, %15 : vector<1x128xi32>
    %c256_i32 = arith.constant 256 : i32
    %18 = vector.broadcast %c256_i32 : i32 to vector<1x128xi32>
    %19 = arith.select %9, %17, %18 : vector<1x128xi1>, vector<1x128xi32>
    %20 = tpu.iota {dimensions = array<i32: 0>} : vector<256x128xi32>
    %21 = vector.broadcast %19 : vector<1x128xi32> to vector<256x128xi32>
    %22 = arith.cmpi sle, %21, %20 : vector<256x128xi32>
    %23 = arith.extui %22 : vector<256x128xi1> to vector<256x128xi32>
    %24 = arith.sitofp %23 : vector<256x128xi32> to vector<256x128xf32>
    %25 = arith.truncf %24 : vector<256x128xf32> to vector<256x128xbf16>
    %c0_6 = arith.constant 0 : index
    %c0_7 = arith.constant 0 : index
    %26 = vector.load %arg7[%c0_6, %c0_7] : memref<256x128xf32, #tpu.memory_space<vmem>>, vector<256x128xf32>
    %c0_8 = arith.constant 0 : index
    %c0_9 = arith.constant 0 : index
    %27 = vector.load %arg2[%c0_8, %c0_9] : memref<128x128xbf16, #tpu.memory_space<vmem>>, vector<128x128xbf16>
    %cst_10 = arith.constant dense<0.000000e+00> : vector<256x128xf32>
    %28 = tpu.matmul %25, %27, %cst_10 {dimension_numbers = #tpu.dot_dimension_numbers<[1], [0], [0], [1], [0, 0, 1, 1], [], []>} : vector<256x128xbf16>, vector<128x128xbf16>, vector<256x128xf32> -> vector<256x128xf32>
    %29 = arith.addf %26, %28 : vector<256x128xf32>
    %c0_11 = arith.constant 0 : index
    %c0_12 = arith.constant 0 : index
    %30 = vector.load %arg7[%c0_11, %c0_12] : memref<256x128xf32, #tpu.memory_space<vmem>>, vector<256x128xf32>
    tpu.vector_store %arg7[%c0_11, %c0_12], %29 {strides = array<i32>} : memref<256x128xf32, #tpu.memory_space<vmem>>, vector<256x128xf32>,
    %c0_i32_13 = arith.constant 0 : i32
    %31 = arith.cmpi eq, %arg0, %c0_i32_13 : i32
    %32 = arith.extui %31 : i1 to i32
    %c0_i32_14 = arith.constant 0 : i32
    %33 = arith.cmpi ne, %32, %c0_i32_14 : i32
    scf.if %33 {
      %c0_15 = arith.constant 0 : index
      %c0_16 = arith.constant 0 : index
      %34 = vector.load %arg7[%c0_15, %c0_16] : memref<256x128xf32, #tpu.memory_space<vmem>>, vector<256x1xf32>
      %35 = vector.extract_strided_slice %34 {offsets = [254, 0], sizes = [1, 1], strides = [1, 1]} : vector<256x1xf32> to vector<1x1xf32>
      %cst_17 = arith.constant 1.000000e+00 : f32
      %36 = vector.broadcast %cst_17 : f32 to vector<1x1xf32>
      %37 = arith.maximumf %35, %36 : vector<1x1xf32>
      %38 = vector.extract_strided_slice %34 {offsets = [0, 0], sizes = [255, 1], strides = [1, 1]} : vector<256x1xf32> to vector<255x1xf32>
      %39 = vector.broadcast %37 : vector<1x1xf32> to vector<255x1xf32>
      %40 = arith.divf %38, %39 : vector<255x1xf32>
      %c0_18 = arith.constant 0 : index
      %c0_19 = arith.constant 0 : index
      %41 = vector.load %arg3[%c0_18, %c0_19] : memref<255x2xf32, #tpu.memory_space<vmem>>, vector<255x2xf32>
      %c0_20 = arith.constant 0 : index
      %c0_21 = arith.constant 0 : index
      %42 = vector.load %arg4[%c0_20, %c0_21] : memref<255x2xf32, #tpu.memory_space<vmem>>, vector<255x2xf32>
      %43 = vector.broadcast %40 : vector<255x1xf32> to vector<255x2xf32>
      %44 = arith.subf %41, %43 : vector<255x2xf32>
      %45 = arith.mulf %44, %44 : vector<255x2xf32>
      %46 = vector.shape_cast %45 : vector<255x2xf32> to vector<1x255x2xf32>
      %cst_22 = arith.constant dense<0.000000e+00> : vector<1xf32>
      %47 = vector.multi_reduction <add>, %46, %cst_22 [1, 2] : vector<1x255x2xf32> to vector<1xf32>
      %48 = vector.shape_cast %47 : vector<1xf32> to vector<1x1x1xf32>
      %49 = vector.extract %48[0, 0, 0] : f32 from vector<1x1x1xf32>
      %50 = vector.broadcast %49 : f32 to vector<1x1xf32>
      %cst_23 = arith.constant 5.100000e+02 : f32
      %51 = vector.broadcast %cst_23 : f32 to vector<1x1xf32>
      %52 = arith.divf %50, %51 : vector<1x1xf32>
      %53 = arith.subf %42, %41 : vector<255x2xf32>
      %54 = arith.mulf %53, %53 : vector<255x2xf32>
      %55 = vector.shape_cast %54 : vector<255x2xf32> to vector<1x255x2xf32>
      %cst_24 = arith.constant dense<0.000000e+00> : vector<1xf32>
      %56 = vector.multi_reduction <add>, %55, %cst_24 [1, 2] : vector<1x255x2xf32> to vector<1xf32>
      %57 = vector.shape_cast %56 : vector<1xf32> to vector<1x1x1xf32>
      %58 = vector.extract %57[0, 0, 0] : f32 from vector<1x1x1xf32>
      %59 = vector.broadcast %58 : f32 to vector<1x1xf32>
      %cst_25 = arith.constant 5.100000e+02 : f32
      %60 = vector.broadcast %cst_25 : f32 to vector<1x1xf32>
      %61 = arith.divf %59, %60 : vector<1x1xf32>
      %62 = vector.broadcast %40 : vector<255x1xf32> to vector<255x2xf32>
      %63 = arith.subf %42, %62 : vector<255x2xf32>
      %64 = arith.mulf %63, %63 : vector<255x2xf32>
      %65 = vector.shape_cast %64 : vector<255x2xf32> to vector<1x255x2xf32>
      %cst_26 = arith.constant dense<0.000000e+00> : vector<1xf32>
      %66 = vector.multi_reduction <add>, %65, %cst_26 [1, 2] : vector<1x255x2xf32> to vector<1xf32>
      %67 = vector.shape_cast %66 : vector<1xf32> to vector<1x1x1xf32>
      %68 = vector.extract %67[0, 0, 0] : f32 from vector<1x1x1xf32>
      %69 = vector.broadcast %68 : f32 to vector<1x1xf32>
      %cst_27 = arith.constant 5.100000e+02 : f32
      %70 = vector.broadcast %cst_27 : f32 to vector<1x1xf32>
      %71 = arith.divf %69, %70 : vector<1x1xf32>
      %cst_28 = arith.constant 0.00999999977 : f32
      %72 = vector.broadcast %cst_28 : f32 to vector<1x1xf32>
      %73 = arith.mulf %72, %71 : vector<1x1xf32>
      %74 = arith.addf %61, %73 : vector<1x1xf32>
      %75 = vector.extract_strided_slice %41 {offsets = [1, 0], sizes = [254, 2], strides = [1, 1]} : vector<255x2xf32> to vector<254x2xf32>
      %76 = vector.extract_strided_slice %41 {offsets = [0, 0], sizes = [254, 2], strides = [1, 1]} : vector<255x2xf32> to vector<254x2xf32>
      %77 = arith.subf %75, %76 : vector<254x2xf32>
      %78 = arith.mulf %77, %77 : vector<254x2xf32>
      %79 = vector.shape_cast %78 : vector<254x2xf32> to vector<1x254x2xf32>
      %cst_29 = arith.constant dense<0.000000e+00> : vector<1xf32>
      %80 = vector.multi_reduction <add>, %79, %cst_29 [1, 2] : vector<1x254x2xf32> to vector<1xf32>
      %81 = vector.shape_cast %80 : vector<1xf32> to vector<1x1x1xf32>
      %82 = vector.extract %81[0, 0, 0] : f32 from vector<1x1x1xf32>
      %83 = vector.broadcast %82 : f32 to vector<1x1xf32>
      %cst_30 = arith.constant 5.080000e+02 : f32
      %84 = vector.broadcast %cst_30 : f32 to vector<1x1xf32>
      %85 = arith.divf %83, %84 : vector<1x1xf32>
      %c0_31 = arith.constant 0 : index
      %c0_32 = arith.constant 0 : index
      %86 = vector.load %arg5[%c0_31, %c0_32] : memref<1x1xf32, #tpu.memory_space<vmem>>, vector<1x1xf32>
      %87 = arith.mulf %86, %52 : vector<1x1xf32>
      %cst_33 = arith.constant 1.000000e-01 : f32
      %88 = vector.broadcast %cst_33 : f32 to vector<1x1xf32>
      %89 = arith.mulf %88, %85 : vector<1x1xf32>
      %90 = arith.addf %87, %89 : vector<1x1xf32>
      %cst_34 = arith.constant 5.000000e-01 : f32
      %91 = vector.broadcast %cst_34 : f32 to vector<1x1xf32>
      %92 = arith.mulf %91, %74 : vector<1x1xf32>
      %93 = arith.addf %90, %92 : vector<1x1xf32>
      %c0_35 = arith.constant 0 : index
      %c0_36 = arith.constant 0 : index
      %94 = vector.load %arg6[%c0_35, %c0_36] : memref<1x1xf32, #tpu.memory_space<vmem>>, vector<1x1xf32>
      tpu.vector_store %arg6[%c0_35, %c0_36], %93 {strides = array<i32>} : memref<1x1xf32, #tpu.memory_space<vmem>>, vector<1x1xf32>,
    } else {
    }
    return
  }
  func.func @transform_0(%arg0: i32) -> (i32, i32, i32) {
    %c0_i32 = arith.constant 0 : i32
    %c0_i32_0 = arith.constant 0 : i32
    %c0_i32_1 = arith.constant 0 : i32
    return %arg0, %c0_i32, %c0_i32_0 : i32, i32, i32
  }
  func.func @transform_1(%arg0: i32) -> (i32, i32) {
    %c0_i32 = arith.constant 0 : i32
    %c0_i32_0 = arith.constant 0 : i32
    %c0_i32_1 = arith.constant 0 : i32
    return %c0_i32, %c0_i32_0 : i32, i32
  }
  func.func @transform_2(%arg0: i32) -> (i32, i32) {
    %c0_i32 = arith.constant 0 : i32
    %c0_i32_0 = arith.constant 0 : i32
    %c0_i32_1 = arith.constant 0 : i32
    return %c0_i32, %c0_i32_0 : i32, i32
  }
  func.func @transform_3(%arg0: i32) -> (i32, i32) {
    %c0_i32 = arith.constant 0 : i32
    %c0_i32_0 = arith.constant 0 : i32
    %c0_i32_1 = arith.constant 0 : i32
    return %c0_i32, %c0_i32_0 : i32, i32
  }
  func.func @transform_4(%arg0: i32) -> (i32, i32) {
    %c0_i32 = arith.constant 0 : i32
    %c0_i32_0 = arith.constant 0 : i32
    %c0_i32_1 = arith.constant 0 : i32
    return %c0_i32, %c0_i32_0 : i32, i32
  }
  func.func @transform_5(%arg0: i32) -> (i32, i32) {
    %c0_i32 = arith.constant 0 : i32
    %c0_i32_0 = arith.constant 0 : i32
    %c0_i32_1 = arith.constant 0 : i32
    return %c0_i32, %c0_i32_0 : i32, i32
  }
}

</mosaic_0001>

<llo_original>
// kernel: tpu_custom_call.1
$region0: #{tpu_custom_call.1}
  #allocation0 [shape = 'u32[]', space=smem, size = 0x4, offset = 0x4, fixed_abs, tag = 'smem constant byte address 0x4 - core index']
  #allocation1 [shape = 'u32[72,128]{1,0:T(1,128)}', space=vmem, size = 0x9000, scoped, tag = 'internal scratch']
  #allocation2 [shape = 'f32[256,128]{1,0:T(8,128)}', space=vmem, size = 0x20000, scoped, tag = 'scratch operand']
  #allocation3 [shape = 'f32[1,1]{1,0:T(1,128)S(1)}', space=vmem, size = 0x200, scoped, tag = 'scoped memory for tpu_custom_call.1']
  %s0 = inlined_call_operand.vmem [shape: f32[1,1,128], index: 0, kind: input, shape index: {}]
  %s1 = inlined_call_operand.vmem [shape: bf16[128,128], index: 1, kind: input, shape index: {}]
  %s2 = inlined_call_operand.vmem [shape: f32[255,2], index: 2, kind: input, shape index: {}]
  %s3 = inlined_call_operand.vmem [shape: f32[255,2], index: 3, kind: input, shape index: {}]
  %s4 = inlined_call_operand.<no memory space> [shape: f32[1,1], index: 4, kind: input, shape index: {}]
  %s5 = inlined_call_operand.hbm [shape: f32[1,1], index: 5, kind: output, shape index: {}]
  %s6 = sld [smem:[#allocation0]]
  $region38: #{tpu_custom_call.1} parent=0
    _
  %s8 = ssub.s32 1, %s6
  %s9 = scalar_select 0, %s8, %s6
  %v10 = vstv %s4
  %11 = vst [vmem:[#allocation3] sm:$0x1] %v10
  $region1: #{tpu_custom_call.1} parent=0
    #allocation4 [shape = 'u8[512]{0}', space=vmem, size = 0x400, scoped, tag = 'output window, operand 0, single buffered']
    #allocation5 [shape = 's32[1]{0}', space=sflag, size = 0x4, scoped, tag = 'scoped memory for tpu_custom_call.1']
    %12 = vsyncpa [#allocation5], 0
    // Predicated region
    $region2: #{tpu_custom_call.1} parent=1 // pred_check
      _
    $region3: #{tpu_custom_call.1} parent=1 // pred_check_branch
      %14 = sbr.rel (0) target = $region5
    $region4: #{tpu_custom_call.1} parent=1 // pred_region
      _
    $region5: #{tpu_custom_call.1} parent=1 // pred_fallthru
      _
    // Predicated region
    $region6: #{tpu_custom_call.1} parent=1 // pred_check
      _
    $region7: #{tpu_custom_call.1} parent=1 // pred_check_branch
      %16 = sbr.rel (0) target = $region9
    $region8: #{tpu_custom_call.1} parent=1 // pred_region
      _
    $region9: #{tpu_custom_call.1} parent=1 // pred_fallthru
      _
    // Predicated region
    $region10: #{tpu_custom_call.1} parent=1 // pred_check
      _
    $region11: #{tpu_custom_call.1} parent=1 // pred_check_branch
      %18 = sbr.rel (0) target = $region13
    $region12: #{tpu_custom_call.1} parent=1 // pred_region
      _
    $region13: #{tpu_custom_call.1} parent=1 // pred_fallthru
      _
    // Predicated region
    $region14: #{tpu_custom_call.1} parent=1 // pred_check
      _
    $region15: #{tpu_custom_call.1} parent=1 // pred_check_branch
      %20 = sbr.rel (0) target = $region17
    $region16: #{tpu_custom_call.1} parent=1 // pred_region
      _
    $region17: #{tpu_custom_call.1} parent=1 // pred_fallthru
      _
    // Predicated region
    $region18: #{tpu_custom_call.1} parent=1 // pred_check
      _
    $region19: #{tpu_custom_call.1} parent=1 // pred_check_branch
      %22 = sbr.rel (0) target = $region21
    $region20: #{tpu_custom_call.1} parent=1 // pred_region
      _
    $region21: #{tpu_custom_call.1} parent=1 // pred_fallthru
      _
    %p23 = scmp.eq.s32.totalorder 0, 0
    // Predicated region
    $region22: #{tpu_custom_call.1} parent=1 // pred_check
      %p24 = pneg %p23
    $region23: #{tpu_custom_call.1} parent=1 // pred_check_branch
      %26 = sbr.rel (%p24) target = $region25
    $region24: #{tpu_custom_call.1} parent=1 // pred_region
      %27 = vst [vmem:[#allocation2] sm:$0xff] 0.0
      %28 = vst [vmem:[#allocation2 + $0x8] sm:$0xff] 0.0
      %29 = vst [vmem:[#allocation2 + $0x10] sm:$0xff] 0.0
      %30 = vst [vmem:[#allocation2 + $0x18] sm:$0xff] 0.0
      %31 = vst [vmem:[#allocation2 + $0x20] sm:$0xff] 0.0
      %32 = vst [vmem:[#allocation2 + $0x28] sm:$0xff] 0.0
      %33 = vst [vmem:[#allocation2 + $0x30] sm:$0xff] 0.0
      %34 = vst [vmem:[#allocation2 + $0x38] sm:$0xff] 0.0
      %35 = vst [vmem:[#allocation2 + $0x40] sm:$0xff] 0.0
      %36 = vst [vmem:[#allocation2 + $0x48] sm:$0xff] 0.0
      %37 = vst [vmem:[#allocation2 + $0x50] sm:$0xff] 0.0
      %38 = vst [vmem:[#allocation2 + $0x58] sm:$0xff] 0.0
      %39 = vst [vmem:[#allocation2 + $0x60] sm:$0xff] 0.0
      %40 = vst [vmem:[#allocation2 + $0x68] sm:$0xff] 0.0
      %41 = vst [vmem:[#allocation2 + $0x70] sm:$0xff] 0.0
      %42 = vst [vmem:[#allocation2 + $0x78] sm:$0xff] 0.0
      %43 = vst [vmem:[#allocation2 + $0x80] sm:$0xff] 0.0
      %44 = vst [vmem:[#allocation2 + $0x88] sm:$0xff] 0.0
      %45 = vst [vmem:[#allocation2 + $0x90] sm:$0xff] 0.0
      %46 = vst [vmem:[#allocation2 + $0x98] sm:$0xff] 0.0
      %47 = vst [vmem:[#allocation2 + $0xa0] sm:$0xff] 0.0
      %48 = vst [vmem:[#allocation2 + $0xa8] sm:$0xff] 0.0
      %49 = vst [vmem:[#allocation2 + $0xb0] sm:$0xff] 0.0
      %50 = vst [vmem:[#allocation2 + $0xb8] sm:$0xff] 0.0
      %51 = vst [vmem:[#allocation2 + $0xc0] sm:$0xff] 0.0
      %52 = vst [vmem:[#allocation2 + $0xc8] sm:$0xff] 0.0
      %53 = vst [vmem:[#allocation2 + $0xd0] sm:$0xff] 0.0
      %54 = vst [vmem:[#allocation2 + $0xd8] sm:$0xff] 0.0
      %55 = vst [vmem:[#allocation2 + $0xe0] sm:$0xff] 0.0
      %56 = vst [vmem:[#allocation2 + $0xe8] sm:$0xff] 0.0
      %57 = vst [vmem:[#allocation2 + $0xf0] sm:$0xff] 0.0
      %58 = vst [vmem:[#allocation2 + $0xf8] sm:$0xff] 0.0
    $region25: #{tpu_custom_call.1} parent=1 // pred_fallthru
      _
    %v59 = vld [vmem:[%s0] sm:$0x1]
    %vm60 = vcmp.ge.f32.partialorder %v59, 0.0
    %vm61 = vcmp.le.f32.partialorder %v59, 1.0
    %vm62 = vmand %vm60, %vm61
    %v63 = vmul.f32 %v59, 255.0
    %v64 = vfloor.f32 %v63
    %v65 = vcvt.f32.s32.to.zero.pseudo %v64
    %vm66 = vcmp.gt.s32.totalorder %v65, 0
    %v67 = vsel %vm66, %v65, 0
    %vm68 = vcmp.lt.s32.totalorder %v67, 254
    %v69 = vsel %vm68, %v67, 254
    %v70 = vsel %vm62, %v69, 256
    %v71 = vlaneseq
    %v72 = vshrl.u32 %v71, 7
    %v73 = vadd.s32 %v72, 8
    %v74 = vadd.s32 %v72, 16
    %v75 = vadd.s32 %v72, 24
    %v76 = vadd.s32 %v72, 32
    %v77 = vadd.s32 %v72, 40
    %v78 = vadd.s32 %v72, 48
    %v79 = vadd.s32 %v72, 56
    %v80 = vadd.s32 %v72, 64
    %v81 = vadd.s32 %v72, 72
    %v82 = vadd.s32 %v72, 80
    %v83 = vadd.s32 %v72, 88
    %v84 = vadd.s32 %v72, 96
    %v85 = vadd.s32 %v72, 104
    %v86 = vadd.s32 %v72, 112
    %v87 = vadd.s32 %v72, 120
    %v88 = vadd.s32 %v72, 128
    %v89 = vadd.s32 %v72, 136
    %v90 = vadd.s32 %v72, 144
    %v91 = vadd.s32 %v72, 152
    %v92 = vadd.s32 %v72, 160
    %v93 = vadd.s32 %v72, 168
    %v94 = vadd.s32 %v72, 176
    %v95 = vadd.s32 %v72, 184
    %v96 = vadd.s32 %v72, 192
    %v97 = vadd.s32 %v72, 200
    %v98 = vadd.s32 %v72, 208
    %v99 = vadd.s32 %v72, 216
    %v100 = vadd.s32 %v72, 224
    %v101 = vadd.s32 %v72, 232
    %v102 = vadd.s32 %v72, 240
    %v103 = vadd.s32 %v72, 248
    %v104 = vperm.slane %v70, 0
    %vm105 = vcmp.le.s32.totalorder %v104, %v72
    %vm106 = vcmp.le.s32.totalorder %v104, %v73
    %vm107 = vcmp.le.s32.totalorder %v104, %v74
    %vm108 = vcmp.le.s32.totalorder %v104, %v75
    %vm109 = vcmp.le.s32.totalorder %v104, %v76
    %vm110 = vcmp.le.s32.totalorder %v104, %v77
    %vm111 = vcmp.le.s32.totalorder %v104, %v78
    %vm112 = vcmp.le.s32.totalorder %v104, %v79
    %vm113 = vcmp.le.s32.totalorder %v104, %v80
    %vm114 = vcmp.le.s32.totalorder %v104, %v81
    %vm115 = vcmp.le.s32.totalorder %v104, %v82
    %vm116 = vcmp.le.s32.totalorder %v104, %v83
    %vm117 = vcmp.le.s32.totalorder %v104, %v84
    %vm118 = vcmp.le.s32.totalorder %v104, %v85
    %vm119 = vcmp.le.s32.totalorder %v104, %v86
    %vm120 = vcmp.le.s32.totalorder %v104, %v87
    %vm121 = vcmp.le.s32.totalorder %v104, %v88
    %vm122 = vcmp.le.s32.totalorder %v104, %v89
    %vm123 = vcmp.le.s32.totalorder %v104, %v90
    %vm124 = vcmp.le.s32.totalorder %v104, %v91
    %vm125 = vcmp.le.s32.totalorder %v104, %v92
    %vm126 = vcmp.le.s32.totalorder %v104, %v93
    %vm127 = vcmp.le.s32.totalorder %v104, %v94
    %vm128 = vcmp.le.s32.totalorder %v104, %v95
    %vm129 = vcmp.le.s32.totalorder %v104, %v96
    %vm130 = vcmp.le.s32.totalorder %v104, %v97
    %vm131 = vcmp.le.s32.totalorder %v104, %v98
    %vm132 = vcmp.le.s32.totalorder %v104, %v99
    %vm133 = vcmp.le.s32.totalorder %v104, %v100
    %vm134 = vcmp.le.s32.totalorder %v104, %v101
    %vm135 = vcmp.le.s32.totalorder %v104, %v102
    %vm136 = vcmp.le.s32.totalorder %v104, %v103
    %v137 = vsel %vm105, 1, 0
    %v138 = vsel %vm106, 1, 0
    %v139 = vsel %vm107, 1, 0
    %v140 = vsel %vm108, 1, 0
    %v141 = vsel %vm109, 1, 0
    %v142 = vsel %vm110, 1, 0
    %v143 = vsel %vm111, 1, 0
    %v144 = vsel %vm112, 1, 0
    %v145 = vsel %vm113, 1, 0
    %v146 = vsel %vm114, 1, 0
    %v147 = vsel %vm115, 1, 0
    %v148 = vsel %vm116, 1, 0
    %v149 = vsel %vm117, 1, 0
    %v150 = vsel %vm118, 1, 0
    %v151 = vsel %vm119, 1, 0
    %v152 = vsel %vm120, 1, 0
    %v153 = vsel %vm121, 1, 0
    %v154 = vsel %vm122, 1, 0
    %v155 = vsel %vm123, 1, 0
    %v156 = vsel %vm124, 1, 0
    %v157 = vsel %vm125, 1, 0
    %v158 = vsel %vm126, 1, 0
    %v159 = vsel %vm127, 1, 0
    %v160 = vsel %vm128, 1, 0
    %v161 = vsel %vm129, 1, 0
    %v162 = vsel %vm130, 1, 0
    %v163 = vsel %vm131, 1, 0
    %v164 = vsel %vm132, 1, 0
    %v165 = vsel %vm133, 1, 0
    %v166 = vsel %vm134, 1, 0
    %v167 = vsel %vm135, 1, 0
    %v168 = vsel %vm136, 1, 0
    %v169 = vcvt.s32.f32 %v137
    %v170 = vcvt.s32.f32 %v138
    %v171 = vcvt.s32.f32 %v139
    %v172 = vcvt.s32.f32 %v140
    %v173 = vcvt.s32.f32 %v141
    %v174 = vcvt.s32.f32 %v142
    %v175 = vcvt.s32.f32 %v143
    %v176 = vcvt.s32.f32 %v144
    %v177 = vcvt.s32.f32 %v145
    %v178 = vcvt.s32.f32 %v146
    %v179 = vcvt.s32.f32 %v147
    %v180 = vcvt.s32.f32 %v148
    %v181 = vcvt.s32.f32 %v149
    %v182 = vcvt.s32.f32 %v150
    %v183 = vcvt.s32.f32 %v151
    %v184 = vcvt.s32.f32 %v152
    %v185 = vcvt.s32.f32 %v153
    %v186 = vcvt.s32.f32 %v154
    %v187 = vcvt.s32.f32 %v155
    %v188 = vcvt.s32.f32 %v156
    %v189 = vcvt.s32.f32 %v157
    %v190 = vcvt.s32.f32 %v158
    %v191 = vcvt.s32.f32 %v159
    %v192 = vcvt.s32.f32 %v160
    %v193 = vcvt.s32.f32 %v161
    %v194 = vcvt.s32.f32 %v162
    %v195 = vcvt.s32.f32 %v163
    %v196 = vcvt.s32.f32 %v164
    %v197 = vcvt.s32.f32 %v165
    %v198 = vcvt.s32.f32 %v166
    %v199 = vcvt.s32.f32 %v167
    %v200 = vcvt.s32.f32 %v168
    %v201 = vpack.c.bf16 %v170, %v169
    %v202 = vpack.c.bf16 %v172, %v171
    %v203 = vpack.c.bf16 %v174, %v173
    %v204 = vpack.c.bf16 %v176, %v175
    %v205 = vpack.c.bf16 %v178, %v177
    %v206 = vpack.c.bf16 %v180, %v179
    %v207 = vpack.c.bf16 %v182, %v181
    %v208 = vpack.c.bf16 %v184, %v183
    %v209 = vpack.c.bf16 %v186, %v185
    %v210 = vpack.c.bf16 %v188, %v187
    %v211 = vpack.c.bf16 %v190, %v189
    %v212 = vpack.c.bf16 %v192, %v191
    %v213 = vpack.c.bf16 %v194, %v193
    %v214 = vpack.c.bf16 %v196, %v195
    %v215 = vpack.c.bf16 %v198, %v197
    %v216 = vpack.c.bf16 %v200, %v199
    %v217 = vld [vmem:[#allocation2] sm:$0xff]
    %v218 = vld [vmem:[#allocation2 + $0x8] sm:$0xff]
    %v219 = vld [vmem:[#allocation2 + $0x10] sm:$0xff]
    %v220 = vld [vmem:[#allocation2 + $0x18] sm:$0xff]
    %v221 = vld [vmem:[#allocation2 + $0x20] sm:$0xff]
    %v222 = vld [vmem:[#allocation2 + $0x28] sm:$0xff]
    %v223 = vld [vmem:[#allocation2 + $0x30] sm:$0xff]
    %v224 = vld [vmem:[#allocation2 + $0x38] sm:$0xff]
    %v225 = vld [vmem:[#allocation2 + $0x40] sm:$0xff]
    %v226 = vld [vmem:[#allocation2 + $0x48] sm:$0xff]
    %v227 = vld [vmem:[#allocation2 + $0x50] sm:$0xff]
    %v228 = vld [vmem:[#allocation2 + $0x58] sm:$0xff]
    %v229 = vld [vmem:[#allocation2 + $0x60] sm:$0xff]
    %v230 = vld [vmem:[#allocation2 + $0x68] sm:$0xff]
    %v231 = vld [vmem:[#allocation2 + $0x70] sm:$0xff]
    %v232 = vld [vmem:[#allocation2 + $0x78] sm:$0xff]
    %v233 = vld [vmem:[#allocation2 + $0x80] sm:$0xff]
    %v234 = vld [vmem:[#allocation2 + $0x88] sm:$0xff]
    %v235 = vld [vmem:[#allocation2 + $0x90] sm:$0xff]
    %v236 = vld [vmem:[#allocation2 + $0x98] sm:$0xff]
    %v237 = vld [vmem:[#allocation2 + $0xa0] sm:$0xff]
    %v238 = vld [vmem:[#allocation2 + $0xa8] sm:$0xff]
    %v239 = vld [vmem:[#allocation2 + $0xb0] sm:$0xff]
    %v240 = vld [vmem:[#allocation2 + $0xb8] sm:$0xff]
    %v241 = vld [vmem:[#allocation2 + $0xc0] sm:$0xff]
    %v242 = vld [vmem:[#allocation2 + $0xc8] sm:$0xff]
    %v243 = vld [vmem:[#allocation2 + $0xd0] sm:$0xff]
    %v244 = vld [vmem:[#allocation2 + $0xd8] sm:$0xff]
    %v245 = vld [vmem:[#allocation2 + $0xe0] sm:$0xff]
    %v246 = vld [vmem:[#allocation2 + $0xe8] sm:$0xff]
    %v247 = vld [vmem:[#allocation2 + $0xf0] sm:$0xff]
    %v248 = vld [vmem:[#allocation2 + $0xf8] sm:$0xff]
    %v249 = vld [vmem:[%s1] sm:$0xf]
    %v250 = vld [vmem:[%s1 + $0x4] sm:$0xf]
    %v251 = vld [vmem:[%s1 + $0x8] sm:$0xf]
    %v252 = vld [vmem:[%s1 + $0xc] sm:$0xf]
    %v253 = vld [vmem:[%s1 + $0x10] sm:$0xf]
    %v254 = vld [vmem:[%s1 + $0x14] sm:$0xf]
    %v255 = vld [vmem:[%s1 + $0x18] sm:$0xf]
    %v256 = vld [vmem:[%s1 + $0x1c] sm:$0xf]
    %v257 = vld [vmem:[%s1 + $0x20] sm:$0xf]
    %v258 = vld [vmem:[%s1 + $0x24] sm:$0xf]
    %v259 = vld [vmem:[%s1 + $0x28] sm:$0xf]
    %v260 = vld [vmem:[%s1 + $0x2c] sm:$0xf]
    %v261 = vld [vmem:[%s1 + $0x30] sm:$0xf]
    %v262 = vld [vmem:[%s1 + $0x34] sm:$0xf]
    %v263 = vld [vmem:[%s1 + $0x38] sm:$0xf]
    %v264 = vld [vmem:[%s1 + $0x3c] sm:$0xf]
    %v281 = vunpack.c.l.b16 %v249
    %v282 = vunpack.c.l.b16 %v250
    %v283 = vunpack.c.l.b16 %v251
    %v284 = vunpack.c.l.b16 %v252
    %v285 = vunpack.c.l.b16 %v253
    %v286 = vunpack.c.l.b16 %v254
    %v287 = vunpack.c.l.b16 %v255
    %v288 = vunpack.c.l.b16 %v256
    %v289 = vunpack.c.l.b16 %v257
    %v290 = vunpack.c.l.b16 %v258
    %v291 = vunpack.c.l.b16 %v259
    %v292 = vunpack.c.l.b16 %v260
    %v293 = vunpack.c.l.b16 %v261
    %v294 = vunpack.c.l.b16 %v262
    %v295 = vunpack.c.l.b16 %v263
    %v296 = vunpack.c.l.b16 %v264
    %v297 = vpack.c.b16 %v282, %v281
    %v298 = vpack.c.b16 %v284, %v283
    %v299 = vpack.c.b16 %v286, %v285
    %v300 = vpack.c.b16 %v288, %v287
    %v301 = vpack.c.b16 %v290, %v289
    %v302 = vpack.c.b16 %v292, %v291
    %v303 = vpack.c.b16 %v294, %v293
    %v304 = vpack.c.b16 %v296, %v295
    %313 = vmatpush.bf16.msra.mxu0 %v304
    %314 = vmatpush.bf16.msra.mxu0 %v303
    %315 = vmatpush.bf16.msra.mxu0 %v302
    %316 = vmatpush.bf16.msra.mxu0 %v301
    %317 = vmatpush.bf16.msra.mxu0 %v300
    %318 = vmatpush.bf16.msra.mxu0 %v299
    %319 = vmatpush.bf16.msra.mxu0 %v298
    %320 = vmatpush.bf16.msra.mxu0 %v297
    %321 = vmatmul.bf16.gmra.mxu0 %v201
    %v322 = vpop.f32.mrf.mxu0
    %v323 = vadd.f32 0.0, %v322
    %v324 = vpop.f32.mrf.mxu0
    %v325 = vadd.f32 0.0, %v324
    %326 = vmatmul.bf16.gmra.mxu0 %v202
    %v327 = vpop.f32.mrf.mxu0
    %v328 = vadd.f32 0.0, %v327
    %v329 = vpop.f32.mrf.mxu0
    %v330 = vadd.f32 0.0, %v329
    %331 = vmatmul.bf16.gmra.mxu0 %v203
    %v332 = vpop.f32.mrf.mxu0
    %v333 = vadd.f32 0.0, %v332
    %v334 = vpop.f32.mrf.mxu0
    %v335 = vadd.f32 0.0, %v334
    %336 = vmatmul.bf16.gmra.mxu0 %v204
    %v337 = vpop.f32.mrf.mxu0
    %v338 = vadd.f32 0.0, %v337
    %v339 = vpop.f32.mrf.mxu0
    %v340 = vadd.f32 0.0, %v339
    %341 = vmatmul.bf16.gmra.mxu0 %v205
    %v342 = vpop.f32.mrf.mxu0
    %v343 = vadd.f32 0.0, %v342
    %v344 = vpop.f32.mrf.mxu0
    %v345 = vadd.f32 0.0, %v344
    %346 = vmatmul.bf16.gmra.mxu0 %v206
    %v347 = vpop.f32.mrf.mxu0
    %v348 = vadd.f32 0.0, %v347
    %v349 = vpop.f32.mrf.mxu0
    %v350 = vadd.f32 0.0, %v349
    %351 = vmatmul.bf16.gmra.mxu0 %v207
    %v352 = vpop.f32.mrf.mxu0
    %v353 = vadd.f32 0.0, %v352
    %v354 = vpop.f32.mrf.mxu0
    %v355 = vadd.f32 0.0, %v354
    %356 = vmatmul.bf16.gmra.mxu0 %v208
    %v357 = vpop.f32.mrf.mxu0
    %v358 = vadd.f32 0.0, %v357
    %v359 = vpop.f32.mrf.mxu0
    %v360 = vadd.f32 0.0, %v359
    %361 = vmatmul.bf16.gmra.mxu0 %v209
    %v362 = vpop.f32.mrf.mxu0
    %v363 = vadd.f32 0.0, %v362
    %v364 = vpop.f32.mrf.mxu0
    %v365 = vadd.f32 0.0, %v364
    %366 = vmatmul.bf16.gmra.mxu0 %v210
    %v367 = vpop.f32.mrf.mxu0
    %v368 = vadd.f32 0.0, %v367
    %v369 = vpop.f32.mrf.mxu0
    %v370 = vadd.f32 0.0, %v369
    %371 = vmatmul.bf16.gmra.mxu0 %v211
    %v372 = vpop.f32.mrf.mxu0
    %v373 = vadd.f32 0.0, %v372
    %v374 = vpop.f32.mrf.mxu0
    %v375 = vadd.f32 0.0, %v374
    %376 = vmatmul.bf16.gmra.mxu0 %v212
    %v377 = vpop.f32.mrf.mxu0
    %v378 = vadd.f32 0.0, %v377
    %v379 = vpop.f32.mrf.mxu0
    %v380 = vadd.f32 0.0, %v379
    %381 = vmatmul.bf16.gmra.mxu0 %v213
    %v382 = vpop.f32.mrf.mxu0
    %v383 = vadd.f32 0.0, %v382
    %v384 = vpop.f32.mrf.mxu0
    %v385 = vadd.f32 0.0, %v384
    %386 = vmatmul.bf16.gmra.mxu0 %v214
    %v387 = vpop.f32.mrf.mxu0
    %v388 = vadd.f32 0.0, %v387
    %v389 = vpop.f32.mrf.mxu0
    %v390 = vadd.f32 0.0, %v389
    %391 = vmatmul.bf16.gmra.mxu0 %v215
    %v392 = vpop.f32.mrf.mxu0
    %v393 = vadd.f32 0.0, %v392
    %v394 = vpop.f32.mrf.mxu0
    %v395 = vadd.f32 0.0, %v394
    %396 = vmatmul.bf16.gmra.mxu0 %v216
    %v397 = vpop.f32.mrf.mxu0
    %v398 = vadd.f32 0.0, %v397
    %v399 = vpop.f32.mrf.mxu0
    %v400 = vadd.f32 0.0, %v399
    %401 = vdwg.mxu0
    %v402 = vadd.f32 %v217, %v323
    %v403 = vadd.f32 %v218, %v325
    %v404 = vadd.f32 %v219, %v328
    %v405 = vadd.f32 %v220, %v330
    %v406 = vadd.f32 %v221, %v333
    %v407 = vadd.f32 %v222, %v335
    %v408 = vadd.f32 %v223, %v338
    %v409 = vadd.f32 %v224, %v340
    %v410 = vadd.f32 %v225, %v343
    %v411 = vadd.f32 %v226, %v345
    %v412 = vadd.f32 %v227, %v348
    %v413 = vadd.f32 %v228, %v350
    %v414 = vadd.f32 %v229, %v353
    %v415 = vadd.f32 %v230, %v355
    %v416 = vadd.f32 %v231, %v358
    %v417 = vadd.f32 %v232, %v360
    %v418 = vadd.f32 %v233, %v363
    %v419 = vadd.f32 %v234, %v365
    %v420 = vadd.f32 %v235, %v368
    %v421 = vadd.f32 %v236, %v370
    %v422 = vadd.f32 %v237, %v373
    %v423 = vadd.f32 %v238, %v375
    %v424 = vadd.f32 %v239, %v378
    %v425 = vadd.f32 %v240, %v380
    %v426 = vadd.f32 %v241, %v383
    %v427 = vadd.f32 %v242, %v385
    %v428 = vadd.f32 %v243, %v388
    %v429 = vadd.f32 %v244, %v390
    %v430 = vadd.f32 %v245, %v393
    %v431 = vadd.f32 %v246, %v395
    %v432 = vadd.f32 %v247, %v398
    %v433 = vadd.f32 %v248, %v400
    %434 = vst [vmem:[#allocation2] sm:$0xff] %v402
    %435 = vst [vmem:[#allocation2 + $0x8] sm:$0xff] %v403
    %436 = vst [vmem:[#allocation2 + $0x10] sm:$0xff] %v404
    %437 = vst [vmem:[#allocation2 + $0x18] sm:$0xff] %v405
    %438 = vst [vmem:[#allocation2 + $0x20] sm:$0xff] %v406
    %439 = vst [vmem:[#allocation2 + $0x28] sm:$0xff] %v407
    %440 = vst [vmem:[#allocation2 + $0x30] sm:$0xff] %v408
    %441 = vst [vmem:[#allocation2 + $0x38] sm:$0xff] %v409
    %442 = vst [vmem:[#allocation2 + $0x40] sm:$0xff] %v410
    %443 = vst [vmem:[#allocation2 + $0x48] sm:$0xff] %v411
    %444 = vst [vmem:[#allocation2 + $0x50] sm:$0xff] %v412
    %445 = vst [vmem:[#allocation2 + $0x58] sm:$0xff] %v413
    %446 = vst [vmem:[#allocation2 + $0x60] sm:$0xff] %v414
    %447 = vst [vmem:[#allocation2 + $0x68] sm:$0xff] %v415
    %448 = vst [vmem:[#allocation2 + $0x70] sm:$0xff] %v416
    %449 = vst [vmem:[#allocation2 + $0x78] sm:$0xff] %v417
    %450 = vst [vmem:[#allocation2 + $0x80] sm:$0xff] %v418
    %451 = vst [vmem:[#allocation2 + $0x88] sm:$0xff] %v419
    %452 = vst [vmem:[#allocation2 + $0x90] sm:$0xff] %v420
    %453 = vst [vmem:[#allocation2 + $0x98] sm:$0xff] %v421
    %454 = vst [vmem:[#allocation2 + $0xa0] sm:$0xff] %v422
    %455 = vst [vmem:[#allocation2 + $0xa8] sm:$0xff] %v423
    %456 = vst [vmem:[#allocation2 + $0xb0] sm:$0xff] %v424
    %457 = vst [vmem:[#allocation2 + $0xb8] sm:$0xff] %v425
    %458 = vst [vmem:[#allocation2 + $0xc0] sm:$0xff] %v426
    %459 = vst [vmem:[#allocation2 + $0xc8] sm:$0xff] %v427
    %460 = vst [vmem:[#allocation2 + $0xd0] sm:$0xff] %v428
    %461 = vst [vmem:[#allocation2 + $0xd8] sm:$0xff] %v429
    %462 = vst [vmem:[#allocation2 + $0xe0] sm:$0xff] %v430
    %463 = vst [vmem:[#allocation2 + $0xe8] sm:$0xff] %v431
    %464 = vst [vmem:[#allocation2 + $0xf0] sm:$0xff] %v432
    %465 = vst [vmem:[#allocation2 + $0xf8] sm:$0xff] %v433
    // Predicated region
    $region26: #{tpu_custom_call.1} parent=1 // pred_check
      %p466 = pneg %p23
    $region27: #{tpu_custom_call.1} parent=1 // pred_check_branch
      %468 = sbr.rel (%p466) target = $region29
    $region28: #{tpu_custom_call.1} parent=1 // pred_region
      %v469 = vld [vmem:[#allocation2] sm:$0xff]
      %v470 = vld [vmem:[#allocation2 + $0x8] sm:$0xff]
      %v471 = vld [vmem:[#allocation2 + $0x10] sm:$0xff]
      %v472 = vld [vmem:[#allocation2 + $0x18] sm:$0xff]
      %v473 = vld [vmem:[#allocation2 + $0x20] sm:$0xff]
      %v474 = vld [vmem:[#allocation2 + $0x28] sm:$0xff]
      %v475 = vld [vmem:[#allocation2 + $0x30] sm:$0xff]
      %v476 = vld [vmem:[#allocation2 + $0x38] sm:$0xff]
      %v477 = vld [vmem:[#allocation2 + $0x40] sm:$0xff]
      %v478 = vld [vmem:[#allocation2 + $0x48] sm:$0xff]
      %v479 = vld [vmem:[#allocation2 + $0x50] sm:$0xff]
      %v480 = vld [vmem:[#allocation2 + $0x58] sm:$0xff]
      %v481 = vld [vmem:[#allocation2 + $0x60] sm:$0xff]
      %v482 = vld [vmem:[#allocation2 + $0x68] sm:$0xff]
      %v483 = vld [vmem:[#allocation2 + $0x70] sm:$0xff]
      %v484 = vld [vmem:[#allocation2 + $0x78] sm:$0xff]
      %v485 = vld [vmem:[#allocation2 + $0x80] sm:$0xff]
      %v486 = vld [vmem:[#allocation2 + $0x88] sm:$0xff]
      %v487 = vld [vmem:[#allocation2 + $0x90] sm:$0xff]
      %v488 = vld [vmem:[#allocation2 + $0x98] sm:$0xff]
      %v489 = vld [vmem:[#allocation2 + $0xa0] sm:$0xff]
      %v490 = vld [vmem:[#allocation2 + $0xa8] sm:$0xff]
      %v491 = vld [vmem:[#allocation2 + $0xb0] sm:$0xff]
      %v492 = vld [vmem:[#allocation2 + $0xb8] sm:$0xff]
      %v493 = vld [vmem:[#allocation2 + $0xc0] sm:$0xff]
      %v494 = vld [vmem:[#allocation2 + $0xc8] sm:$0xff]
      %v495 = vld [vmem:[#allocation2 + $0xd0] sm:$0xff]
      %v496 = vld [vmem:[#allocation2 + $0xd8] sm:$0xff]
      %v497 = vld [vmem:[#allocation2 + $0xe0] sm:$0xff]
      %v498 = vld [vmem:[#allocation2 + $0xe8] sm:$0xff]
      %v499 = vld [vmem:[#allocation2 + $0xf0] sm:$0xff]
      %v500 = vld [vmem:[#allocation2 + $0xf8] sm:$0xff]
      %v501 = vmax.f32 %v500, 1.0
      %v502 = vperm.slane %v501, 6
      %v503 = vrcp.pop %v502
      %v504 = vmul.f32 %v502, %v503
      %v505 = vsub.f32 1.0, %v504
      %v506 = vmul.f32 %v503, %v505
      %v507 = vadd.f32 %v503, %v506
      %vm508 = vweird.f32 %v502
      %vm509 = vweird.f32 %v503
      %vm510 = vmor %vm508, %vm509
      %v511 = vsel %vm510, %v503, %v507
      %v512 = vand.u32 2147483647, %v502
      %vm513 = vcmp.eq.f32.partialorder %v512, 8.507059e+37
      %v514 = vand.u32 %v502, 2147483648
      %v515 = vor.u32 1.1754944e-38, %v514
      %v516 = vsel %vm513, %v515, %v511
      %v517 = vmul.f32 %v469, %v516
      %v518 = vmul.f32 %v470, %v516
      %v519 = vmul.f32 %v471, %v516
      %v520 = vmul.f32 %v472, %v516
      %v521 = vmul.f32 %v473, %v516
      %v522 = vmul.f32 %v474, %v516
      %v523 = vmul.f32 %v475, %v516
      %v524 = vmul.f32 %v476, %v516
      %v525 = vmul.f32 %v477, %v516
      %v526 = vmul.f32 %v478, %v516
      %v527 = vmul.f32 %v479, %v516
      %v528 = vmul.f32 %v480, %v516
      %v529 = vmul.f32 %v481, %v516
      %v530 = vmul.f32 %v482, %v516
      %v531 = vmul.f32 %v483, %v516
      %v532 = vmul.f32 %v484, %v516
      %v533 = vmul.f32 %v485, %v516
      %v534 = vmul.f32 %v486, %v516
      %v535 = vmul.f32 %v487, %v516
      %v536 = vmul.f32 %v488, %v516
      %v537 = vmul.f32 %v489, %v516
      %v538 = vmul.f32 %v490, %v516
      %v539 = vmul.f32 %v491, %v516
      %v540 = vmul.f32 %v492, %v516
      %v541 = vmul.f32 %v493, %v516
      %v542 = vmul.f32 %v494, %v516
      %v543 = vmul.f32 %v495, %v516
      %v544 = vmul.f32 %v496, %v516
      %v545 = vmul.f32 %v497, %v516
      %v546 = vmul.f32 %v498, %v516
      %v547 = vmul.f32 %v499, %v516
      %v548 = vmul.f32 %v500, %v516
      %v549 = vld [vmem:[%s2] sm:$0xff]
      %v550 = vld [vmem:[%s2 + $0x8] sm:$0xff]
      %v551 = vld [vmem:[%s2 + $0x10] sm:$0xff]
      %v552 = vld [vmem:[%s2 + $0x18] sm:$0xff]
      %v553 = vld [vmem:[%s2 + $0x20] sm:$0xff]
      %v554 = vld [vmem:[%s2 + $0x28] sm:$0xff]
      %v555 = vld [vmem:[%s2 + $0x30] sm:$0xff]
      %v556 = vld [vmem:[%s2 + $0x38] sm:$0xff]
      %v557 = vld [vmem:[%s2 + $0x40] sm:$0xff]
      %v558 = vld [vmem:[%s2 + $0x48] sm:$0xff]
      %v559 = vld [vmem:[%s2 + $0x50] sm:$0xff]
      %v560 = vld [vmem:[%s2 + $0x58] sm:$0xff]
      %v561 = vld [vmem:[%s2 + $0x60] sm:$0xff]
      %v562 = vld [vmem:[%s2 + $0x68] sm:$0xff]
      %v563 = vld [vmem:[%s2 + $0x70] sm:$0xff]
      %v564 = vld [vmem:[%s2 + $0x78] sm:$0xff]
      %v565 = vld [vmem:[%s2 + $0x80] sm:$0xff]
      %v566 = vld [vmem:[%s2 + $0x88] sm:$0xff]
      %v567 = vld [vmem:[%s2 + $0x90] sm:$0xff]
      %v568 = vld [vmem:[%s2 + $0x98] sm:$0xff]
      %v569 = vld [vmem:[%s2 + $0xa0] sm:$0xff]
      %v570 = vld [vmem:[%s2 + $0xa8] sm:$0xff]
      %v571 = vld [vmem:[%s2 + $0xb0] sm:$0xff]
      %v572 = vld [vmem:[%s2 + $0xb8] sm:$0xff]
      %v573 = vld [vmem:[%s2 + $0xc0] sm:$0xff]
      %v574 = vld [vmem:[%s2 + $0xc8] sm:$0xff]
      %v575 = vld [vmem:[%s2 + $0xd0] sm:$0xff]
      %v576 = vld [vmem:[%s2 + $0xd8] sm:$0xff]
      %v577 = vld [vmem:[%s2 + $0xe0] sm:$0xff]
      %v578 = vld [vmem:[%s2 + $0xe8] sm:$0xff]
      %v579 = vld [vmem:[%s2 + $0xf0] sm:$0xff]
      %v580 = vld [vmem:[%s2 + $0xf8] sm:$0x7f]
      %v581 = vld [vmem:[%s3] sm:$0xff]
      %v582 = vld [vmem:[%s3 + $0x8] sm:$0xff]
      %v583 = vld [vmem:[%s3 + $0x10] sm:$0xff]
      %v584 = vld [vmem:[%s3 + $0x18] sm:$0xff]
      %v585 = vld [vmem:[%s3 + $0x20] sm:$0xff]
      %v586 = vld [vmem:[%s3 + $0x28] sm:$0xff]
      %v587 = vld [vmem:[%s3 + $0x30] sm:$0xff]
      %v588 = vld [vmem:[%s3 + $0x38] sm:$0xff]
      %v589 = vld [vmem:[%s3 + $0x40] sm:$0xff]
      %v590 = vld [vmem:[%s3 + $0x48] sm:$0xff]
      %v591 = vld [vmem:[%s3 + $0x50] sm:$0xff]
      %v592 = vld [vmem:[%s3 + $0x58] sm:$0xff]
      %v593 = vld [vmem:[%s3 + $0x60] sm:$0xff]
      %v594 = vld [vmem:[%s3 + $0x68] sm:$0xff]
      %v595 = vld [vmem:[%s3 + $0x70] sm:$0xff]
      %v596 = vld [vmem:[%s3 + $0x78] sm:$0xff]
      %v597 = vld [vmem:[%s3 + $0x80] sm:$0xff]
      %v598 = vld [vmem:[%s3 + $0x88] sm:$0xff]
      %v599 = vld [vmem:[%s3 + $0x90] sm:$0xff]
      %v600 = vld [vmem:[%s3 + $0x98] sm:$0xff]
      %v601 = vld [vmem:[%s3 + $0xa0] sm:$0xff]
      %v602 = vld [vmem:[%s3 + $0xa8] sm:$0xff]
      %v603 = vld [vmem:[%s3 + $0xb0] sm:$0xff]
      %v604 = vld [vmem:[%s3 + $0xb8] sm:$0xff]
      %v605 = vld [vmem:[%s3 + $0xc0] sm:$0xff]
      %v606 = vld [vmem:[%s3 + $0xc8] sm:$0xff]
      %v607 = vld [vmem:[%s3 + $0xd0] sm:$0xff]
      %v608 = vld [vmem:[%s3 + $0xd8] sm:$0xff]
      %v609 = vld [vmem:[%s3 + $0xe0] sm:$0xff]
      %v610 = vld [vmem:[%s3 + $0xe8] sm:$0xff]
      %v611 = vld [vmem:[%s3 + $0xf0] sm:$0xff]
      %v612 = vld [vmem:[%s3 + $0xf8] sm:$0x7f]
      %614 = vset.pattern.permute.xlu0 0
      %615 = vperm.xlu0 %614, %v517
      %v616 = vpop.permute.xlu0 %615
      %619 = vset.pattern.permute.xlu0 0
      %620 = vperm.xlu0 %619, %v518
      %v621 = vpop.permute.xlu0 %620
      %624 = vset.pattern.permute.xlu0 0
      %625 = vperm.xlu0 %624, %v519
      %v626 = vpop.permute.xlu0 %625
      %629 = vset.pattern.permute.xlu0 0
      %630 = vperm.xlu0 %629, %v520
      %v631 = vpop.permute.xlu0 %630
      %634 = vset.pattern.permute.xlu0 0
      %635 = vperm.xlu0 %634, %v521
      %v636 = vpop.permute.xlu0 %635
      %639 = vset.pattern.permute.xlu0 0
      %640 = vperm.xlu0 %639, %v522
      %v641 = vpop.permute.xlu0 %640
      %644 = vset.pattern.permute.xlu0 0
      %645 = vperm.xlu0 %644, %v523
      %v646 = vpop.permute.xlu0 %645
      %649 = vset.pattern.permute.xlu0 0
      %650 = vperm.xlu0 %649, %v524
      %v651 = vpop.permute.xlu0 %650
      %654 = vset.pattern.permute.xlu0 0
      %655 = vperm.xlu0 %654, %v525
      %v656 = vpop.permute.xlu0 %655
      %659 = vset.pattern.permute.xlu0 0
      %660 = vperm.xlu0 %659, %v526
      %v661 = vpop.permute.xlu0 %660
      %664 = vset.pattern.permute.xlu0 0
      %665 = vperm.xlu0 %664, %v527
      %v666 = vpop.permute.xlu0 %665
      %669 = vset.pattern.permute.xlu0 0
      %670 = vperm.xlu0 %669, %v528
      %v671 = vpop.permute.xlu0 %670
      %674 = vset.pattern.permute.xlu0 0
      %675 = vperm.xlu0 %674, %v529
      %v676 = vpop.permute.xlu0 %675
      %679 = vset.pattern.permute.xlu0 0
      %680 = vperm.xlu0 %679, %v530
      %v681 = vpop.permute.xlu0 %680
      %684 = vset.pattern.permute.xlu0 0
      %685 = vperm.xlu0 %684, %v531
      %v686 = vpop.permute.xlu0 %685
      %689 = vset.pattern.permute.xlu0 0
      %690 = vperm.xlu0 %689, %v532
      %v691 = vpop.permute.xlu0 %690
      %694 = vset.pattern.permute.xlu0 0
      %695 = vperm.xlu0 %694, %v533
      %v696 = vpop.permute.xlu0 %695
      %699 = vset.pattern.permute.xlu0 0
      %700 = vperm.xlu0 %699, %v534
      %v701 = vpop.permute.xlu0 %700
      %704 = vset.pattern.permute.xlu0 0
      %705 = vperm.xlu0 %704, %v535
      %v706 = vpop.permute.xlu0 %705
      %709 = vset.pattern.permute.xlu0 0
      %710 = vperm.xlu0 %709, %v536
      %v711 = vpop.permute.xlu0 %710
      %714 = vset.pattern.permute.xlu0 0
      %715 = vperm.xlu0 %714, %v537
      %v716 = vpop.permute.xlu0 %715
      %719 = vset.pattern.permute.xlu0 0
      %720 = vperm.xlu0 %719, %v538
      %v721 = vpop.permute.xlu0 %720
      %724 = vset.pattern.permute.xlu0 0
      %725 = vperm.xlu0 %724, %v539
      %v726 = vpop.permute.xlu0 %725
      %729 = vset.pattern.permute.xlu0 0
      %730 = vperm.xlu0 %729, %v540
      %v731 = vpop.permute.xlu0 %730
      %734 = vset.pattern.permute.xlu0 0
      %735 = vperm.xlu0 %734, %v541
      %v736 = vpop.permute.xlu0 %735
      %739 = vset.pattern.permute.xlu0 0
      %740 = vperm.xlu0 %739, %v542
      %v741 = vpop.permute.xlu0 %740
      %744 = vset.pattern.permute.xlu0 0
      %745 = vperm.xlu0 %744, %v543
      %v746 = vpop.permute.xlu0 %745
      %749 = vset.pattern.permute.xlu0 0
      %750 = vperm.xlu0 %749, %v544
      %v751 = vpop.permute.xlu0 %750
      %754 = vset.pattern.permute.xlu0 0
      %755 = vperm.xlu0 %754, %v545
      %v756 = vpop.permute.xlu0 %755
      %759 = vset.pattern.permute.xlu0 0
      %760 = vperm.xlu0 %759, %v546
      %v761 = vpop.permute.xlu0 %760
      %764 = vset.pattern.permute.xlu0 0
      %765 = vperm.xlu0 %764, %v547
      %v766 = vpop.permute.xlu0 %765
      %769 = vset.pattern.permute.xlu0 0
      %770 = vperm.xlu0 %769, %v548
      %v771 = vpop.permute.xlu0 %770
      %v773 = vsub.f32 %v549, %v616
      %v774 = vsub.f32 %v550, %v621
      %v775 = vsub.f32 %v551, %v626
      %v776 = vsub.f32 %v552, %v631
      %v777 = vsub.f32 %v553, %v636
      %v778 = vsub.f32 %v554, %v641
      %v779 = vsub.f32 %v555, %v646
      %v780 = vsub.f32 %v556, %v651
      %v781 = vsub.f32 %v557, %v656
      %v782 = vsub.f32 %v558, %v661
      %v783 = vsub.f32 %v559, %v666
      %v784 = vsub.f32 %v560, %v671
      %v785 = vsub.f32 %v561, %v676
      %v786 = vsub.f32 %v562, %v681
      %v787 = vsub.f32 %v563, %v686
      %v788 = vsub.f32 %v564, %v691
      %v789 = vsub.f32 %v565, %v696
      %v790 = vsub.f32 %v566, %v701
      %v791 = vsub.f32 %v567, %v706
      %v792 = vsub.f32 %v568, %v711
      %v793 = vsub.f32 %v569, %v716
      %v794 = vsub.f32 %v570, %v721
      %v795 = vsub.f32 %v571, %v726
      %v796 = vsub.f32 %v572, %v731
      %v797 = vsub.f32 %v573, %v736
      %v798 = vsub.f32 %v574, %v741
      %v799 = vsub.f32 %v575, %v746
      %v800 = vsub.f32 %v576, %v751
      %v801 = vsub.f32 %v577, %v756
      %v802 = vsub.f32 %v578, %v761
      %v803 = vsub.f32 %v579, %v766
      %v804 = vsub.f32 %v580, %v771
      %v805 = vmul.f32 %v773, %v773
      %v806 = vmul.f32 %v774, %v774
      %v807 = vmul.f32 %v775, %v775
      %v808 = vmul.f32 %v776, %v776
      %v809 = vmul.f32 %v777, %v777
      %v810 = vmul.f32 %v778, %v778
      %v811 = vmul.f32 %v779, %v779
      %v812 = vmul.f32 %v780, %v780
      %v813 = vmul.f32 %v781, %v781
      %v814 = vmul.f32 %v782, %v782
      %v815 = vmul.f32 %v783, %v783
      %v816 = vmul.f32 %v784, %v784
      %v817 = vmul.f32 %v785, %v785
      %v818 = vmul.f32 %v786, %v786
      %v819 = vmul.f32 %v787, %v787
      %v820 = vmul.f32 %v788, %v788
      %v821 = vmul.f32 %v789, %v789
      %v822 = vmul.f32 %v790, %v790
      %v823 = vmul.f32 %v791, %v791
      %v824 = vmul.f32 %v792, %v792
      %v825 = vmul.f32 %v793, %v793
      %v826 = vmul.f32 %v794, %v794
      %v827 = vmul.f32 %v795, %v795
      %v828 = vmul.f32 %v796, %v796
      %v829 = vmul.f32 %v797, %v797
      %v830 = vmul.f32 %v798, %v798
      %v831 = vmul.f32 %v799, %v799
      %v832 = vmul.f32 %v800, %v800
      %v833 = vmul.f32 %v801, %v801
      %v834 = vmul.f32 %v802, %v802
      %v835 = vmul.f32 %v803, %v803
      %v836 = vmul.f32 %v804, %v804
      %vm837 = vcmask 15360
      %v838 = vsel %vm837, %v805, 0.0
      %v839 = vsel %vm837, %v806, 0.0
      %v840 = vadd.f32 %v838, %v839
      %v841 = vsel %vm837, %v807, 0.0
      %v842 = vadd.f32 %v840, %v841
      %v843 = vsel %vm837, %v808, 0.0
      %v844 = vadd.f32 %v842, %v843
      %v845 = vsel %vm837, %v809, 0.0
      %v846 = vadd.f32 %v844, %v845
      %v847 = vsel %vm837, %v810, 0.0
      %v848 = vadd.f32 %v846, %v847
      %v849 = vsel %vm837, %v811, 0.0
      %v850 = vadd.f32 %v848, %v849
      %v851 = vsel %vm837, %v812, 0.0
      %v852 = vadd.f32 %v850, %v851
      %v853 = vsel %vm837, %v813, 0.0
      %v854 = vadd.f32 %v852, %v853
      %v855 = vsel %vm837, %v814, 0.0
      %v856 = vadd.f32 %v854, %v855
      %v857 = vsel %vm837, %v815, 0.0
      %v858 = vadd.f32 %v856, %v857
      %v859 = vsel %vm837, %v816, 0.0
      %v860 = vadd.f32 %v858, %v859
      %v861 = vsel %vm837, %v817, 0.0
      %v862 = vadd.f32 %v860, %v861
      %v863 = vsel %vm837, %v818, 0.0
      %v864 = vadd.f32 %v862, %v863
      %v865 = vsel %vm837, %v819, 0.0
      %v866 = vadd.f32 %v864, %v865
      %v867 = vsel %vm837, %v820, 0.0
      %v868 = vadd.f32 %v866, %v867
      %v869 = vsel %vm837, %v821, 0.0
      %v870 = vadd.f32 %v868, %v869
      %v871 = vsel %vm837, %v822, 0.0
      %v872 = vadd.f32 %v870, %v871
      %v873 = vsel %vm837, %v823, 0.0
      %v874 = vadd.f32 %v872, %v873
      %v875 = vsel %vm837, %v824, 0.0
      %v876 = vadd.f32 %v874, %v875
      %v877 = vsel %vm837, %v825, 0.0
      %v878 = vadd.f32 %v876, %v877
      %v879 = vsel %vm837, %v826, 0.0
      %v880 = vadd.f32 %v878, %v879
      %v881 = vsel %vm837, %v827, 0.0
      %v882 = vadd.f32 %v880, %v881
      %v883 = vsel %vm837, %v828, 0.0
      %v884 = vadd.f32 %v882, %v883
      %v885 = vsel %vm837, %v829, 0.0
      %v886 = vadd.f32 %v884, %v885
      %v887 = vsel %vm837, %v830, 0.0
      %v888 = vadd.f32 %v886, %v887
      %v889 = vsel %vm837, %v831, 0.0
      %v890 = vadd.f32 %v888, %v889
      %v891 = vsel %vm837, %v832, 0.0
      %v892 = vadd.f32 %v890, %v891
      %v893 = vsel %vm837, %v833, 0.0
      %v894 = vadd.f32 %v892, %v893
      %v895 = vsel %vm837, %v834, 0.0
      %v896 = vadd.f32 %v894, %v895
      %v897 = vsel %vm837, %v835, 0.0
      %v898 = vadd.f32 %v896, %v897
      %vm899 = vcmask 14336
      %v900 = vsel %vm899, %v836, 0.0
      %v901 = vadd.f32 %v898, %v900
      %902 = vadd.xlane.f32.xlu0 %v901
      %v903 = vpop.xlane.xlu0 %902
      %v904 = vrot.slane %v903, 4
      %v905 = vadd.f32 %v903, %v904
      %v906 = vrot.slane %v905, 2
      %v907 = vadd.f32 %v905, %v906
      %v908 = vrot.slane %v907, 1
      %v909 = vadd.f32 %v907, %v908
      %s910 = vtos %v909
      %v911 = vstv %s910
      %v912 = vrcp.pop 510.0
      %v913 = vmul.f32 510.0, %v912
      %v914 = vsub.f32 1.0, %v913
      %v915 = vmul.f32 %v912, %v914
      %v916 = vadd.f32 %v912, %v915
      %vm917 = vweird.f32 %v912
      %v918 = vsel %vm917, %v912, %v916
      %v919 = vmul.f32 %v911, %v918
      %v920 = vsub.f32 %v581, %v549
      %v921 = vsub.f32 %v582, %v550
      %v922 = vsub.f32 %v583, %v551
      %v923 = vsub.f32 %v584, %v552
      %v924 = vsub.f32 %v585, %v553
      %v925 = vsub.f32 %v586, %v554
      %v926 = vsub.f32 %v587, %v555
      %v927 = vsub.f32 %v588, %v556
      %v928 = vsub.f32 %v589, %v557
      %v929 = vsub.f32 %v590, %v558
      %v930 = vsub.f32 %v591, %v559
      %v931 = vsub.f32 %v592, %v560
      %v932 = vsub.f32 %v593, %v561
      %v933 = vsub.f32 %v594, %v562
      %v934 = vsub.f32 %v595, %v563
      %v935 = vsub.f32 %v596, %v564
      %v936 = vsub.f32 %v597, %v565
      %v937 = vsub.f32 %v598, %v566
      %v938 = vsub.f32 %v599, %v567
      %v939 = vsub.f32 %v600, %v568
      %v940 = vsub.f32 %v601, %v569
      %v941 = vsub.f32 %v602, %v570
      %v942 = vsub.f32 %v603, %v571
      %v943 = vsub.f32 %v604, %v572
      %v944 = vsub.f32 %v605, %v573
      %v945 = vsub.f32 %v606, %v574
      %v946 = vsub.f32 %v607, %v575
      %v947 = vsub.f32 %v608, %v576
      %v948 = vsub.f32 %v609, %v577
      %v949 = vsub.f32 %v610, %v578
      %v950 = vsub.f32 %v611, %v579
      %v951 = vsub.f32 %v612, %v580
      %v952 = vmul.f32 %v920, %v920
      %v953 = vmul.f32 %v921, %v921
      %v954 = vmul.f32 %v922, %v922
      %v955 = vmul.f32 %v923, %v923
      %v956 = vmul.f32 %v924, %v924
      %v957 = vmul.f32 %v925, %v925
      %v958 = vmul.f32 %v926, %v926
      %v959 = vmul.f32 %v927, %v927
      %v960 = vmul.f32 %v928, %v928
      %v961 = vmul.f32 %v929, %v929
      %v962 = vmul.f32 %v930, %v930
      %v963 = vmul.f32 %v931, %v931
      %v964 = vmul.f32 %v932, %v932
      %v965 = vmul.f32 %v933, %v933
      %v966 = vmul.f32 %v934, %v934
      %v967 = vmul.f32 %v935, %v935
      %v968 = vmul.f32 %v936, %v936
      %v969 = vmul.f32 %v937, %v937
      %v970 = vmul.f32 %v938, %v938
      %v971 = vmul.f32 %v939, %v939
      %v972 = vmul.f32 %v940, %v940
      %v973 = vmul.f32 %v941, %v941
      %v974 = vmul.f32 %v942, %v942
      %v975 = vmul.f32 %v943, %v943
      %v976 = vmul.f32 %v944, %v944
      %v977 = vmul.f32 %v945, %v945
      %v978 = vmul.f32 %v946, %v946
      %v979 = vmul.f32 %v947, %v947
      %v980 = vmul.f32 %v948, %v948
      %v981 = vmul.f32 %v949, %v949
      %v982 = vmul.f32 %v950, %v950
      %v983 = vmul.f32 %v951, %v951
      %v984 = vsel %vm837, %v952, 0.0
      %v985 = vsel %vm837, %v953, 0.0
      %v986 = vadd.f32 %v984, %v985
      %v987 = vsel %vm837, %v954, 0.0
      %v988 = vadd.f32 %v986, %v987
      %v989 = vsel %vm837, %v955, 0.0
      %v990 = vadd.f32 %v988, %v989
      %v991 = vsel %vm837, %v956, 0.0
      %v992 = vadd.f32 %v990, %v991
      %v993 = vsel %vm837, %v957, 0.0
      %v994 = vadd.f32 %v992, %v993
      %v995 = vsel %vm837, %v958, 0.0
      %v996 = vadd.f32 %v994, %v995
      %v997 = vsel %vm837, %v959, 0.0
      %v998 = vadd.f32 %v996, %v997
      %v999 = vsel %vm837, %v960, 0.0
      %v1000 = vadd.f32 %v998, %v999
      %v1001 = vsel %vm837, %v961, 0.0
      %v1002 = vadd.f32 %v1000, %v1001
      %v1003 = vsel %vm837, %v962, 0.0
      %v1004 = vadd.f32 %v1002, %v1003
      %v1005 = vsel %vm837, %v963, 0.0
      %v1006 = vadd.f32 %v1004, %v1005
      %v1007 = vsel %vm837, %v964, 0.0
      %v1008 = vadd.f32 %v1006, %v1007
      %v1009 = vsel %vm837, %v965, 0.0
      %v1010 = vadd.f32 %v1008, %v1009
      %v1011 = vsel %vm837, %v966, 0.0
      %v1012 = vadd.f32 %v1010, %v1011
      %v1013 = vsel %vm837, %v967, 0.0
      %v1014 = vadd.f32 %v1012, %v1013
      %v1015 = vsel %vm837, %v968, 0.0
      %v1016 = vadd.f32 %v1014, %v1015
      %v1017 = vsel %vm837, %v969, 0.0
      %v1018 = vadd.f32 %v1016, %v1017
      %v1019 = vsel %vm837, %v970, 0.0
      %v1020 = vadd.f32 %v1018, %v1019
      %v1021 = vsel %vm837, %v971, 0.0
      %v1022 = vadd.f32 %v1020, %v1021
      %v1023 = vsel %vm837, %v972, 0.0
      %v1024 = vadd.f32 %v1022, %v1023
      %v1025 = vsel %vm837, %v973, 0.0
      %v1026 = vadd.f32 %v1024, %v1025
      %v1027 = vsel %vm837, %v974, 0.0
      %v1028 = vadd.f32 %v1026, %v1027
      %v1029 = vsel %vm837, %v975, 0.0
      %v1030 = vadd.f32 %v1028, %v1029
      %v1031 = vsel %vm837, %v976, 0.0
      %v1032 = vadd.f32 %v1030, %v1031
      %v1033 = vsel %vm837, %v977, 0.0
      %v1034 = vadd.f32 %v1032, %v1033
      %v1035 = vsel %vm837, %v978, 0.0
      %v1036 = vadd.f32 %v1034, %v1035
      %v1037 = vsel %vm837, %v979, 0.0
      %v1038 = vadd.f32 %v1036, %v1037
      %v1039 = vsel %vm837, %v980, 0.0
      %v1040 = vadd.f32 %v1038, %v1039
      %v1041 = vsel %vm837, %v981, 0.0
      %v1042 = vadd.f32 %v1040, %v1041
      %v1043 = vsel %vm837, %v982, 0.0
      %v1044 = vadd.f32 %v1042, %v1043
      %v1045 = vsel %vm899, %v983, 0.0
      %v1046 = vadd.f32 %v1044, %v1045
      %1047 = vadd.xlane.f32.xlu0 %v1046
      %v1048 = vpop.xlane.xlu0 %1047
      %v1049 = vrot.slane %v1048, 4
      %v1050 = vadd.f32 %v1048, %v1049
      %v1051 = vrot.slane %v1050, 2
      %v1052 = vadd.f32 %v1050, %v1051
      %v1053 = vrot.slane %v1052, 1
      %v1054 = vadd.f32 %v1052, %v1053
      %s1055 = vtos %v1054
      %v1056 = vstv %s1055
      %v1057 = vmul.f32 %v1056, %v918
      %v1058 = vsub.f32 %v581, %v616
      %v1059 = vsub.f32 %v582, %v621
      %v1060 = vsub.f32 %v583, %v626
      %v1061 = vsub.f32 %v584, %v631
      %v1062 = vsub.f32 %v585, %v636
      %v1063 = vsub.f32 %v586, %v641
      %v1064 = vsub.f32 %v587, %v646
      %v1065 = vsub.f32 %v588, %v651
      %v1066 = vsub.f32 %v589, %v656
      %v1067 = vsub.f32 %v590, %v661
      %v1068 = vsub.f32 %v591, %v666
      %v1069 = vsub.f32 %v592, %v671
      %v1070 = vsub.f32 %v593, %v676
      %v1071 = vsub.f32 %v594, %v681
      %v1072 = vsub.f32 %v595, %v686
      %v1073 = vsub.f32 %v596, %v691
      %v1074 = vsub.f32 %v597, %v696
      %v1075 = vsub.f32 %v598, %v701
      %v1076 = vsub.f32 %v599, %v706
      %v1077 = vsub.f32 %v600, %v711
      %v1078 = vsub.f32 %v601, %v716
      %v1079 = vsub.f32 %v602, %v721
      %v1080 = vsub.f32 %v603, %v726
      %v1081 = vsub.f32 %v604, %v731
      %v1082 = vsub.f32 %v605, %v736
      %v1083 = vsub.f32 %v606, %v741
      %v1084 = vsub.f32 %v607, %v746
      %v1085 = vsub.f32 %v608, %v751
      %v1086 = vsub.f32 %v609, %v756
      %v1087 = vsub.f32 %v610, %v761
      %v1088 = vsub.f32 %v611, %v766
      %v1089 = vsub.f32 %v612, %v771
      %v1090 = vmul.f32 %v1058, %v1058
      %v1091 = vmul.f32 %v1059, %v1059
      %v1092 = vmul.f32 %v1060, %v1060
      %v1093 = vmul.f32 %v1061, %v1061
      %v1094 = vmul.f32 %v1062, %v1062
      %v1095 = vmul.f32 %v1063, %v1063
      %v1096 = vmul.f32 %v1064, %v1064
      %v1097 = vmul.f32 %v1065, %v1065
      %v1098 = vmul.f32 %v1066, %v1066
      %v1099 = vmul.f32 %v1067, %v1067
      %v1100 = vmul.f32 %v1068, %v1068
      %v1101 = vmul.f32 %v1069, %v1069
      %v1102 = vmul.f32 %v1070, %v1070
      %v1103 = vmul.f32 %v1071, %v1071
      %v1104 = vmul.f32 %v1072, %v1072
      %v1105 = vmul.f32 %v1073, %v1073
      %v1106 = vmul.f32 %v1074, %v1074
      %v1107 = vmul.f32 %v1075, %v1075
      %v1108 = vmul.f32 %v1076, %v1076
      %v1109 = vmul.f32 %v1077, %v1077
      %v1110 = vmul.f32 %v1078, %v1078
      %v1111 = vmul.f32 %v1079, %v1079
      %v1112 = vmul.f32 %v1080, %v1080
      %v1113 = vmul.f32 %v1081, %v1081
      %v1114 = vmul.f32 %v1082, %v1082
      %v1115 = vmul.f32 %v1083, %v1083
      %v1116 = vmul.f32 %v1084, %v1084
      %v1117 = vmul.f32 %v1085, %v1085
      %v1118 = vmul.f32 %v1086, %v1086
      %v1119 = vmul.f32 %v1087, %v1087
      %v1120 = vmul.f32 %v1088, %v1088
      %v1121 = vmul.f32 %v1089, %v1089
      %v1122 = vsel %vm837, %v1090, 0.0
      %v1123 = vsel %vm837, %v1091, 0.0
      %v1124 = vadd.f32 %v1122, %v1123
      %v1125 = vsel %vm837, %v1092, 0.0
      %v1126 = vadd.f32 %v1124, %v1125
      %v1127 = vsel %vm837, %v1093, 0.0
      %v1128 = vadd.f32 %v1126, %v1127
      %v1129 = vsel %vm837, %v1094, 0.0
      %v1130 = vadd.f32 %v1128, %v1129
      %v1131 = vsel %vm837, %v1095, 0.0
      %v1132 = vadd.f32 %v1130, %v1131
      %v1133 = vsel %vm837, %v1096, 0.0
      %v1134 = vadd.f32 %v1132, %v1133
      %v1135 = vsel %vm837, %v1097, 0.0
      %v1136 = vadd.f32 %v1134, %v1135
      %v1137 = vsel %vm837, %v1098, 0.0
      %v1138 = vadd.f32 %v1136, %v1137
      %v1139 = vsel %vm837, %v1099, 0.0
      %v1140 = vadd.f32 %v1138, %v1139
      %v1141 = vsel %vm837, %v1100, 0.0
      %v1142 = vadd.f32 %v1140, %v1141
      %v1143 = vsel %vm837, %v1101, 0.0
      %v1144 = vadd.f32 %v1142, %v1143
      %v1145 = vsel %vm837, %v1102, 0.0
      %v1146 = vadd.f32 %v1144, %v1145
      %v1147 = vsel %vm837, %v1103, 0.0
      %v1148 = vadd.f32 %v1146, %v1147
      %v1149 = vsel %vm837, %v1104, 0.0
      %v1150 = vadd.f32 %v1148, %v1149
      %v1151 = vsel %vm837, %v1105, 0.0
      %v1152 = vadd.f32 %v1150, %v1151
      %v1153 = vsel %vm837, %v1106, 0.0
      %v1154 = vadd.f32 %v1152, %v1153
      %v1155 = vsel %vm837, %v1107, 0.0
      %v1156 = vadd.f32 %v1154, %v1155
      %v1157 = vsel %vm837, %v1108, 0.0
      %v1158 = vadd.f32 %v1156, %v1157
      %v1159 = vsel %vm837, %v1109, 0.0
      %v1160 = vadd.f32 %v1158, %v1159
      %v1161 = vsel %vm837, %v1110, 0.0
      %v1162 = vadd.f32 %v1160, %v1161
      %v1163 = vsel %vm837, %v1111, 0.0
      %v1164 = vadd.f32 %v1162, %v1163
      %v1165 = vsel %vm837, %v1112, 0.0
      %v1166 = vadd.f32 %v1164, %v1165
      %v1167 = vsel %vm837, %v1113, 0.0
      %v1168 = vadd.f32 %v1166, %v1167
      %v1169 = vsel %vm837, %v1114, 0.0
      %v1170 = vadd.f32 %v1168, %v1169
      %v1171 = vsel %vm837, %v1115, 0.0
      %v1172 = vadd.f32 %v1170, %v1171
      %v1173 = vsel %vm837, %v1116, 0.0
      %v1174 = vadd.f32 %v1172, %v1173
      %v1175 = vsel %vm837, %v1117, 0.0
      %v1176 = vadd.f32 %v1174, %v1175
      %v1177 = vsel %vm837, %v1118, 0.0
      %v1178 = vadd.f32 %v1176, %v1177
      %v1179 = vsel %vm837, %v1119, 0.0
      %v1180 = vadd.f32 %v1178, %v1179
      %v1181 = vsel %vm837, %v1120, 0.0
      %v1182 = vadd.f32 %v1180, %v1181
      %v1183 = vsel %vm899, %v1121, 0.0
      %v1184 = vadd.f32 %v1182, %v1183
      %1185 = vadd.xlane.f32.xlu0 %v1184
      %v1186 = vpop.xlane.xlu0 %1185
      %v1187 = vrot.slane %v1186, 4
      %v1188 = vadd.f32 %v1186, %v1187
      %v1189 = vrot.slane %v1188, 2
      %v1190 = vadd.f32 %v1188, %v1189
      %v1191 = vrot.slane %v1190, 1
      %v1192 = vadd.f32 %v1190, %v1191
      %s1193 = vtos %v1192
      %v1194 = vstv %s1193
      %v1195 = vmul.f32 %v1194, %v918
      %v1196 = vmul.f32 %v1195, 0.01
      %v1197 = vadd.f32 %v1057, %v1196
      %vm1230 = vcmask 1040384
      %v1231 = vrot.slane %v549, 7
      %v1232 = vrot.slane %v550, 7
      %v1233 = vsel %vm1230, %v1231, %v1232
      %v1234 = vrot.slane %v551, 7
      %v1235 = vsel %vm1230, %v1232, %v1234
      %v1236 = vrot.slane %v552, 7
      %v1237 = vsel %vm1230, %v1234, %v1236
      %v1238 = vrot.slane %v553, 7
      %v1239 = vsel %vm1230, %v1236, %v1238
      %v1240 = vrot.slane %v554, 7
      %v1241 = vsel %vm1230, %v1238, %v1240
      %v1242 = vrot.slane %v555, 7
      %v1243 = vsel %vm1230, %v1240, %v1242
      %v1244 = vrot.slane %v556, 7
      %v1245 = vsel %vm1230, %v1242, %v1244
      %v1246 = vrot.slane %v557, 7
      %v1247 = vsel %vm1230, %v1244, %v1246
      %v1248 = vrot.slane %v558, 7
      %v1249 = vsel %vm1230, %v1246, %v1248
      %v1250 = vrot.slane %v559, 7
      %v1251 = vsel %vm1230, %v1248, %v1250
      %v1252 = vrot.slane %v560, 7
      %v1253 = vsel %vm1230, %v1250, %v1252
      %v1254 = vrot.slane %v561, 7
      %v1255 = vsel %vm1230, %v1252, %v1254
      %v1256 = vrot.slane %v562, 7
      %v1257 = vsel %vm1230, %v1254, %v1256
      %v1258 = vrot.slane %v563, 7
      %v1259 = vsel %vm1230, %v1256, %v1258
      %v1260 = vrot.slane %v564, 7
      %v1261 = vsel %vm1230, %v1258, %v1260
      %v1262 = vrot.slane %v565, 7
      %v1263 = vsel %vm1230, %v1260, %v1262
      %v1264 = vrot.slane %v566, 7
      %v1265 = vsel %vm1230, %v1262, %v1264
      %v1266 = vrot.slane %v567, 7
      %v1267 = vsel %vm1230, %v1264, %v1266
      %v1268 = vrot.slane %v568, 7
      %v1269 = vsel %vm1230, %v1266, %v1268
      %v1270 = vrot.slane %v569, 7
      %v1271 = vsel %vm1230, %v1268, %v1270
      %v1272 = vrot.slane %v570, 7
      %v1273 = vsel %vm1230, %v1270, %v1272
      %v1274 = vrot.slane %v571, 7
      %v1275 = vsel %vm1230, %v1272, %v1274
      %v1276 = vrot.slane %v572, 7
      %v1277 = vsel %vm1230, %v1274, %v1276
      %v1278 = vrot.slane %v573, 7
      %v1279 = vsel %vm1230, %v1276, %v1278
      %v1280 = vrot.slane %v574, 7
      %v1281 = vsel %vm1230, %v1278, %v1280
      %v1282 = vrot.slane %v575, 7
      %v1283 = vsel %vm1230, %v1280, %v1282
      %v1284 = vrot.slane %v576, 7
      %v1285 = vsel %vm1230, %v1282, %v1284
      %v1286 = vrot.slane %v577, 7
      %v1287 = vsel %vm1230, %v1284, %v1286
      %v1288 = vrot.slane %v578, 7
      %v1289 = vsel %vm1230, %v1286, %v1288
      %v1290 = vrot.slane %v579, 7
      %v1291 = vsel %vm1230, %v1288, %v1290
      %v1292 = vrot.slane %v580, 7
      %v1293 = vsel %vm1230, %v1290, %v1292
      %v1326 = vsub.f32 %v549, %v1231
      %v1327 = vsub.f32 %v550, %v1233
      %v1328 = vsub.f32 %v551, %v1235
      %v1329 = vsub.f32 %v552, %v1237
      %v1330 = vsub.f32 %v553, %v1239
      %v1331 = vsub.f32 %v554, %v1241
      %v1332 = vsub.f32 %v555, %v1243
      %v1333 = vsub.f32 %v556, %v1245
      %v1334 = vsub.f32 %v557, %v1247
      %v1335 = vsub.f32 %v558, %v1249
      %v1336 = vsub.f32 %v559, %v1251
      %v1337 = vsub.f32 %v560, %v1253
      %v1338 = vsub.f32 %v561, %v1255
      %v1339 = vsub.f32 %v562, %v1257
      %v1340 = vsub.f32 %v563, %v1259
      %v1341 = vsub.f32 %v564, %v1261
      %v1342 = vsub.f32 %v565, %v1263
      %v1343 = vsub.f32 %v566, %v1265
      %v1344 = vsub.f32 %v567, %v1267
      %v1345 = vsub.f32 %v568, %v1269
      %v1346 = vsub.f32 %v569, %v1271
      %v1347 = vsub.f32 %v570, %v1273
      %v1348 = vsub.f32 %v571, %v1275
      %v1349 = vsub.f32 %v572, %v1277
      %v1350 = vsub.f32 %v573, %v1279
      %v1351 = vsub.f32 %v574, %v1281
      %v1352 = vsub.f32 %v575, %v1283
      %v1353 = vsub.f32 %v576, %v1285
      %v1354 = vsub.f32 %v577, %v1287
      %v1355 = vsub.f32 %v578, %v1289
      %v1356 = vsub.f32 %v579, %v1291
      %v1357 = vsub.f32 %v580, %v1293
      %v1358 = vmul.f32 %v1326, %v1326
      %v1359 = vmul.f32 %v1327, %v1327
      %v1360 = vmul.f32 %v1328, %v1328
      %v1361 = vmul.f32 %v1329, %v1329
      %v1362 = vmul.f32 %v1330, %v1330
      %v1363 = vmul.f32 %v1331, %v1331
      %v1364 = vmul.f32 %v1332, %v1332
      %v1365 = vmul.f32 %v1333, %v1333
      %v1366 = vmul.f32 %v1334, %v1334
      %v1367 = vmul.f32 %v1335, %v1335
      %v1368 = vmul.f32 %v1336, %v1336
      %v1369 = vmul.f32 %v1337, %v1337
      %v1370 = vmul.f32 %v1338, %v1338
      %v1371 = vmul.f32 %v1339, %v1339
      %v1372 = vmul.f32 %v1340, %v1340
      %v1373 = vmul.f32 %v1341, %v1341
      %v1374 = vmul.f32 %v1342, %v1342
      %v1375 = vmul.f32 %v1343, %v1343
      %v1376 = vmul.f32 %v1344, %v1344
      %v1377 = vmul.f32 %v1345, %v1345
      %v1378 = vmul.f32 %v1346, %v1346
      %v1379 = vmul.f32 %v1347, %v1347
      %v1380 = vmul.f32 %v1348, %v1348
      %v1381 = vmul.f32 %v1349, %v1349
      %v1382 = vmul.f32 %v1350, %v1350
      %v1383 = vmul.f32 %v1351, %v1351
      %v1384 = vmul.f32 %v1352, %v1352
      %v1385 = vmul.f32 %v1353, %v1353
      %v1386 = vmul.f32 %v1354, %v1354
      %v1387 = vmul.f32 %v1355, %v1355
      %v1388 = vmul.f32 %v1356, %v1356
      %v1389 = vmul.f32 %v1357, %v1357
      %vm1422 = vcmask 1046528
      %v1423 = vrot.slane %v1358, 1
      %v1424 = vrot.slane %v1359, 1
      %v1425 = vsel %vm1422, %v1423, %v1424
      %v1426 = vrot.slane %v1360, 1
      %v1427 = vsel %vm1422, %v1424, %v1426
      %v1428 = vrot.slane %v1361, 1
      %v1429 = vsel %vm1422, %v1426, %v1428
      %v1430 = vrot.slane %v1362, 1
      %v1431 = vsel %vm1422, %v1428, %v1430
      %v1432 = vrot.slane %v1363, 1
      %v1433 = vsel %vm1422, %v1430, %v1432
      %v1434 = vrot.slane %v1364, 1
      %v1435 = vsel %vm1422, %v1432, %v1434
      %v1436 = vrot.slane %v1365, 1
      %v1437 = vsel %vm1422, %v1434, %v1436
      %v1438 = vrot.slane %v1366, 1
      %v1439 = vsel %vm1422, %v1436, %v1438
      %v1440 = vrot.slane %v1367, 1
      %v1441 = vsel %vm1422, %v1438, %v1440
      %v1442 = vrot.slane %v1368, 1
      %v1443 = vsel %vm1422, %v1440, %v1442
      %v1444 = vrot.slane %v1369, 1
      %v1445 = vsel %vm1422, %v1442, %v1444
      %v1446 = vrot.slane %v1370, 1
      %v1447 = vsel %vm1422, %v1444, %v1446
      %v1448 = vrot.slane %v1371, 1
      %v1449 = vsel %vm1422, %v1446, %v1448
      %v1450 = vrot.slane %v1372, 1
      %v1451 = vsel %vm1422, %v1448, %v1450
      %v1452 = vrot.slane %v1373, 1
      %v1453 = vsel %vm1422, %v1450, %v1452
      %v1454 = vrot.slane %v1374, 1
      %v1455 = vsel %vm1422, %v1452, %v1454
      %v1456 = vrot.slane %v1375, 1
      %v1457 = vsel %vm1422, %v1454, %v1456
      %v1458 = vrot.slane %v1376, 1
      %v1459 = vsel %vm1422, %v1456, %v1458
      %v1460 = vrot.slane %v1377, 1
      %v1461 = vsel %vm1422, %v1458, %v1460
      %v1462 = vrot.slane %v1378, 1
      %v1463 = vsel %vm1422, %v1460, %v1462
      %v1464 = vrot.slane %v1379, 1
      %v1465 = vsel %vm1422, %v1462, %v1464
      %v1466 = vrot.slane %v1380, 1
      %v1467 = vsel %vm1422, %v1464, %v1466
      %v1468 = vrot.slane %v1381, 1
      %v1469 = vsel %vm1422, %v1466, %v1468
      %v1470 = vrot.slane %v1382, 1
      %v1471 = vsel %vm1422, %v1468, %v1470
      %v1472 = vrot.slane %v1383, 1
      %v1473 = vsel %vm1422, %v1470, %v1472
      %v1474 = vrot.slane %v1384, 1
      %v1475 = vsel %vm1422, %v1472, %v1474
      %v1476 = vrot.slane %v1385, 1
      %v1477 = vsel %vm1422, %v1474, %v1476
      %v1478 = vrot.slane %v1386, 1
      %v1479 = vsel %vm1422, %v1476, %v1478
      %v1480 = vrot.slane %v1387, 1
      %v1481 = vsel %vm1422, %v1478, %v1480
      %v1482 = vrot.slane %v1388, 1
      %v1483 = vsel %vm1422, %v1480, %v1482
      %v1484 = vrot.slane %v1389, 1
      %v1485 = vsel %vm1422, %v1482, %v1484
      %v1518 = vsel %vm837, %v1425, 0.0
      %v1519 = vsel %vm837, %v1427, 0.0
      %v1520 = vadd.f32 %v1518, %v1519
      %v1521 = vsel %vm837, %v1429, 0.0
      %v1522 = vadd.f32 %v1520, %v1521
      %v1523 = vsel %vm837, %v1431, 0.0
      %v1524 = vadd.f32 %v1522, %v1523
      %v1525 = vsel %vm837, %v1433, 0.0
      %v1526 = vadd.f32 %v1524, %v1525
      %v1527 = vsel %vm837, %v1435, 0.0
      %v1528 = vadd.f32 %v1526, %v1527
      %v1529 = vsel %vm837, %v1437, 0.0
      %v1530 = vadd.f32 %v1528, %v1529
      %v1531 = vsel %vm837, %v1439, 0.0
      %v1532 = vadd.f32 %v1530, %v1531
      %v1533 = vsel %vm837, %v1441, 0.0
      %v1534 = vadd.f32 %v1532, %v1533
      %v1535 = vsel %vm837, %v1443, 0.0
      %v1536 = vadd.f32 %v1534, %v1535
      %v1537 = vsel %vm837, %v1445, 0.0
      %v1538 = vadd.f32 %v1536, %v1537
      %v1539 = vsel %vm837, %v1447, 0.0
      %v1540 = vadd.f32 %v1538, %v1539
      %v1541 = vsel %vm837, %v1449, 0.0
      %v1542 = vadd.f32 %v1540, %v1541
      %v1543 = vsel %vm837, %v1451, 0.0
      %v1544 = vadd.f32 %v1542, %v1543
      %v1545 = vsel %vm837, %v1453, 0.0
      %v1546 = vadd.f32 %v1544, %v1545
      %v1547 = vsel %vm837, %v1455, 0.0
      %v1548 = vadd.f32 %v1546, %v1547
      %v1549 = vsel %vm837, %v1457, 0.0
      %v1550 = vadd.f32 %v1548, %v1549
      %v1551 = vsel %vm837, %v1459, 0.0
      %v1552 = vadd.f32 %v1550, %v1551
      %v1553 = vsel %vm837, %v1461, 0.0
      %v1554 = vadd.f32 %v1552, %v1553
      %v1555 = vsel %vm837, %v1463, 0.0
      %v1556 = vadd.f32 %v1554, %v1555
      %v1557 = vsel %vm837, %v1465, 0.0
      %v1558 = vadd.f32 %v1556, %v1557
      %v1559 = vsel %vm837, %v1467, 0.0
      %v1560 = vadd.f32 %v1558, %v1559
      %v1561 = vsel %vm837, %v1469, 0.0
      %v1562 = vadd.f32 %v1560, %v1561
      %v1563 = vsel %vm837, %v1471, 0.0
      %v1564 = vadd.f32 %v1562, %v1563
      %v1565 = vsel %vm837, %v1473, 0.0
      %v1566 = vadd.f32 %v1564, %v1565
      %v1567 = vsel %vm837, %v1475, 0.0
      %v1568 = vadd.f32 %v1566, %v1567
      %v1569 = vsel %vm837, %v1477, 0.0
      %v1570 = vadd.f32 %v1568, %v1569
      %v1571 = vsel %vm837, %v1479, 0.0
      %v1572 = vadd.f32 %v1570, %v1571
      %v1573 = vsel %vm837, %v1481, 0.0
      %v1574 = vadd.f32 %v1572, %v1573
      %v1575 = vsel %vm837, %v1483, 0.0
      %v1576 = vadd.f32 %v1574, %v1575
      %v1577 = vsel %vm837, %v1485, 0.0
      %v1578 = vadd.f32 %v1576, %v1577
      %vm1579 = vcmask 13312
      %v1580 = vsel %vm1579, %v1484, 0.0
      %v1581 = vadd.f32 %v1578, %v1580
      %1582 = vadd.xlane.f32.xlu0 %v1581
      %v1583 = vpop.xlane.xlu0 %1582
      %v1584 = vrot.slane %v1583, 4
      %v1585 = vadd.f32 %v1583, %v1584
      %v1586 = vrot.slane %v1585, 2
      %v1587 = vadd.f32 %v1585, %v1586
      %v1588 = vrot.slane %v1587, 1
      %v1589 = vadd.f32 %v1587, %v1588
      %s1590 = vtos %v1589
      %v1591 = vstv %s1590
      %v1592 = vrcp.pop 508.0
      %v1593 = vmul.f32 508.0, %v1592
      %v1594 = vsub.f32 1.0, %v1593
      %v1595 = vmul.f32 %v1592, %v1594
      %v1596 = vadd.f32 %v1592, %v1595
      %vm1597 = vweird.f32 %v1592
      %v1598 = vsel %vm1597, %v1592, %v1596
      %v1599 = vmul.f32 %v1591, %v1598
      %v1600 = vld [vmem:[#allocation3] sm:$0x1]
      %v1601 = vmul.f32 %v1600, %v919
      %v1602 = vmul.f32 %v1599, 0.1
      %v1603 = vadd.f32 %v1601, %v1602
      %v1604 = vmul.f32 %v1197, 0.5
      %v1605 = vadd.f32 %v1603, %v1604
      %vm1606 = vcmask 0
      %1607 = vst.msk [vmem:[#allocation4] sm:$0x1] %vm1606, %v1605
    $region29: #{tpu_custom_call.1} parent=1 // pred_fallthru
      _
    // Predicated region
    $region30: #{tpu_custom_call.1} parent=1 // pred_check
      _
    $region31: #{tpu_custom_call.1} parent=1 // pred_check_branch
      %1609 = sbr.rel (0) target = $region33
    $region32: #{tpu_custom_call.1} parent=1 // pred_region
      %1611 = vsyncadd [#allocation5], 0
      %s1613 = sshll.u32 [#allocation4], 4
      %s1614 = int_to_ptr.vmem [resolvable:$true] %s1613
      %s1615 = sshll.u32 %s5, 4
      %s1616 = int_to_ptr.hbm [resolvable:$true] %s1615
      %1618 = dma.vmem_to_hbm [thread:$0]  %s1614, 16, %s1616, [#allocation5]
    $region33: #{tpu_custom_call.1} parent=1 // pred_fallthru
      _
    // Predicated region
    $region34: #{tpu_custom_call.1} parent=1 // pred_check
      _
    $region35: #{tpu_custom_call.1} parent=1 // pred_check_branch
      %1620 = sbr.rel (0) target = $region37
    $region36: #{tpu_custom_call.1} parent=1 // pred_region
      %1622 = dma.done [#allocation5], 16
    $region37: #{tpu_custom_call.1} parent=1 // pred_fallthru
      _
    %1623 = vsyncpa [#allocation5], 1

</llo_original>
